<compile_context>
chip_gen: v6e
topology: v6e:2x2x1
jax: 0.10.0
libtpu: 0.0.40
codegen_flags: <defaults>
</compile_context>

<pallas_src>
import functools

import jax
import jax.numpy as jnp
from jax.experimental import pallas as pl
from jax.experimental.pallas import tpu as pltpu


def _round_up(x, m):
    return ((x + m - 1) // m) * m


def _pad_gate_cols(w, H, Hp):
    """(rows, 3H) -> (rows, 3*Hp): each gate moved to its own 128-aligned block."""
    gates = [w[:, g * H:(g + 1) * H] for g in range(3)]
    gates = [jnp.pad(g, ((0, 0), (0, Hp - H))) for g in gates]
    return jnp.concatenate(gates, axis=-1)


def _rnn_encoder_kernel(xt_ref, wih_ref, bmerged_ref, whh_ref, bhn_ref,
                        wlin_ref, blin_ref, z0_ref, gi_ref,
                        *, seq_len, batch_pad, hidden_pad):
    """Fused input projection + serial GRU recurrence + LeakyReLU + Linear.

    xt_ref     : (T*Bp, Dinp)  flipped, padded inputs (f32)
    wih_ref    : (Dinp, 3*Hp)  input weights, gates lane-aligned (f32)
    bmerged_ref: (1, 3*Hp)     b_ih with b_hh[r,z] pre-summed in (f32)
    whh_ref    : (Hp, 3*Hp)    recurrent weights, gates lane-aligned (bf16)
    bhn_ref    : (1, Hp)       hidden bias of the n gate (scaled by r) (f32)
    wlin_ref   : (Hp, L2p)     hidden -> latent weights, lane-padded (f32)
    blin_ref   : (1, L2p)
    z0_ref     : (Bp, L2p)     output (f32)
    gi_ref     : (T*Bp, 3*Hp)  VMEM scratch for the hoisted input projection
    """
    T, Bp, Hp = seq_len, batch_pad, hidden_pad

    # Input projection for all timesteps as one well-shaped MXU matmul,
    # off the serial dependence chain.
    gi_ref[...] = (jnp.dot(xt_ref[...], wih_ref[...],
                           preferred_element_type=jnp.float32)
                   + bmerged_ref[...])

    # Recurrent weights loaded once (bf16 MXU operands); broadcast hoisted.
    whh = whh_ref[...]                                       # (Hp, 3Hp) bf16
    bhn = jnp.broadcast_to(bhn_ref[...], (Bp, Hp))           # (Bp, Hp)  f32

    def step(t, h):
        off = pl.multiple_of(t * Bp, Bp)
        gi = gi_ref[pl.ds(off, Bp), :]                       # (Bp, 3Hp) f32
        gh = jnp.dot(h.astype(jnp.bfloat16), whh,
                     preferred_element_type=jnp.float32)     # (Bp, 3Hp) f32
        # Gate slices are 128-lane aligned -> full-vreg VPU/EUP ops, f32 only.
        r = jax.nn.sigmoid(gi[:, :Hp] + gh[:, :Hp])
        z = jax.nn.sigmoid(gi[:, Hp:2 * Hp] + gh[:, Hp:2 * Hp])
        n = jnp.tanh(gi[:, 2 * Hp:] + r * (gh[:, 2 * Hp:] + bhn))
        return (1.0 - z) * n + z * h

    h0 = jnp.zeros((Bp, Hp), jnp.float32)
    # Full unroll for short sequences; partial unroll keeps LLO scheduling
    # visibility for long ones without blowing instruction memory.
    unroll = T if T <= 32 else 8
    h = jax.lax.fori_loop(0, T, step, h0, unroll=unroll)

    # LeakyReLU(0.1) then Linear(hidden -> 2*latent), lane-dense output store.
    h_act = jnp.where(h > 0, h, 0.1 * h)
    z0_ref[...] = (jnp.dot(h_act, wlin_ref[...],
                           preferred_element_type=jnp.float32)
                   + blin_ref[...]).astype(z0_ref.dtype)


def rnn_encoder_forward(x_obs, t_obs, params, *, latent_dim):
    """x_obs: (T, B, input_dim), t_obs: (T, B, 1).

    Returns (z0_mean, z0_log_var), each (B, latent_dim)."""
    T, B, input_dim = x_obs.shape
    H = params["w_hh"].shape[0]
    Din = input_dim + 1
    L2 = 2 * latent_dim

    Hp = _round_up(max(H, 128), 128)      # lane-align gates
    Bp = _round_up(max(B, 8), 8)          # fill vreg sublanes / MXU rows
    Dinp = _round_up(Din, 8)              # sublane-align RHS of input proj
    L2p = _round_up(max(L2, 128), 128)    # lane-dense output store

    # TODO(synk): nodetracker's first_difference convention assumed: first diff = 0.
    t_diff = jnp.concatenate([jnp.zeros_like(t_obs[:1]), t_obs[1:] - t_obs[:-1]], axis=0)
    xt = jnp.concatenate([x_obs, t_diff], axis=-1)            # (T, B, Din)
    xt = jnp.flip(xt, axis=0)                                 # torch.flip(xt, dims=[0])
    xt = jnp.pad(xt, ((0, 0), (0, Bp - B), (0, Dinp - Din)))  # (T, Bp, Dinp)
    xt2d = xt.reshape(T * Bp, Dinp).astype(jnp.float32)

    w_ih, w_hh = params["w_ih"], params["w_hh"]               # (Din,3H), (H,3H)
    b_ih, b_hh = params["b_ih"], params["b_hh"]               # (1,3H),  (1,3H)
    w_lin, b_lin = params["w_lin"], params["b_lin"]           # (H,2L),  (1,2L)

    # Lane-aligned, zero-padded parameter layout.
    w_ih_pad = jnp.pad(_pad_gate_cols(w_ih, H, Hp), ((0, Dinp - Din), (0, 0)))
    w_hh_pad = jnp.pad(_pad_gate_cols(w_hh, H, Hp), ((0, Hp - H), (0, 0)))
    w_hh_bf16 = w_hh_pad.astype(jnp.bfloat16)                 # MXU operand only
    # Merge r/z hidden biases into the input-side bias; keep b_hh_n separate
    # (it is scaled by r inside the recurrence).
    b_merged = jnp.concatenate(
        [b_ih[:, :2 * H] + b_hh[:, :2 * H], b_ih[:, 2 * H:]], axis=-1)
    b_merged_pad = _pad_gate_cols(b_merged, H, Hp)            # (1, 3Hp)
    b_hh_n_pad = jnp.pad(b_hh[:, 2 * H:], ((0, 0), (0, Hp - H)))          # (1, Hp)
    w_lin_pad = jnp.pad(w_lin, ((0, Hp - H), (0, L2p - L2)))              # (Hp, L2p)
    b_lin_pad = jnp.pad(b_lin, ((0, 0), (0, L2p - L2)))                   # (1, L2p)

    kernel = functools.partial(_rnn_encoder_kernel,
                               seq_len=T, batch_pad=Bp, hidden_pad=Hp)
    vmem_spec = pl.BlockSpec(memory_space=pltpu.MemorySpace.VMEM)

    flops = (2 * T * Bp * Dinp * 3 * Hp          # input projection
             + 2 * T * Bp * Hp * 3 * Hp          # recurrence
             + 2 * Bp * Hp * L2p)                # output linear
    transcendentals = 3 * T * Bp * Hp            # 2x sigmoid + tanh per step
    bytes_accessed = 4 * (T * Bp * Dinp + Dinp * 3 * Hp + 3 * Hp
                          + Hp + Hp * L2p + L2p + Bp * L2p) + 2 * Hp * 3 * Hp
    cost = pl.CostEstimate(flops=flops, transcendentals=transcendentals,
                           bytes_accessed=bytes_accessed)

    z0_padded = pl.pallas_call(
        kernel,
        out_shape=jax.ShapeDtypeStruct((Bp, L2p), jnp.float32),
        in_specs=[vmem_spec] * 7,
        out_specs=vmem_spec,
        scratch_shapes=[pltpu.VMEM((T * Bp, 3 * Hp), jnp.float32)],
        cost_estimate=cost,
    )(xt2d, w_ih_pad, b_merged_pad, w_hh_bf16, b_hh_n_pad, w_lin_pad, b_lin_pad)

    z0 = z0_padded[:B, :L2]
    return z0[:, :latent_dim], z0[:, latent_dim:]


def _reference_forward(x_obs, t_obs, params, *, latent_dim):
    """Pure-JAX f32 reference (PyTorch GRU gate math) for correctness checking."""
    H = params["w_hh"].shape[0]
    t_diff = jnp.concatenate([jnp.zeros_like(t_obs[:1]), t_obs[1:] - t_obs[:-1]], axis=0)
    xt = jnp.concatenate([x_obs, t_diff], axis=-1)
    xt = jnp.flip(xt, axis=0)

    def step(h, x):
        gi = x @ params["w_ih"] + params["b_ih"]
        gh = h @ params["w_hh"] + params["b_hh"]
        i_r, i_z, i_n = gi[:, :H], gi[:, H:2 * H], gi[:, 2 * H:]
        h_r, h_z, h_n = gh[:, :H], gh[:, H:2 * H], gh[:, 2 * H:]
        r = jax.nn.sigmoid(i_r + h_r)
        z = jax.nn.sigmoid(i_z + h_z)
        n = jnp.tanh(i_n + r * h_n)
        return (1.0 - z) * n + z * h, None

    h0 = jnp.zeros((x_obs.shape[1], H), jnp.float32)
    h, _ = jax.lax.scan(step, h0, xt)
    h = jnp.where(h > 0, h, 0.1 * h)
    z0 = h @ params["w_lin"] + params["b_lin"]
    return z0[:, :latent_dim], z0[:, latent_dim:]


def init_params(key, input_dim, hidden_dim, latent_dim):
    Din = input_dim + 1
    ks = jax.random.split(key, 6)
    s = 1.0 / jnp.sqrt(hidden_dim)
    return {
        # stored transposed relative to PyTorch (so kernel does x @ W)
        "w_ih": jax.random.uniform(ks[0], (Din, 3 * hidden_dim), jnp.float32, -s, s),
        "w_hh": jax.random.uniform(ks[1], (hidden_dim, 3 * hidden_dim), jnp.float32, -s, s),
        "b_ih": jax.random.uniform(ks[2], (1, 3 * hidden_dim), jnp.float32, -s, s),
        "b_hh": jax.random.uniform(ks[3], (1, 3 * hidden_dim), jnp.float32, -s, s),
        "w_lin": jax.random.uniform(ks[4], (hidden_dim, 2 * latent_dim), jnp.float32, -s, s),
        "b_lin": jax.random.uniform(ks[5], (1, 2 * latent_dim), jnp.float32, -s, s),
    }


if __name__ == "__main__":
    T, B = 8, 2
    input_dim, hidden_dim, latent_dim = 4, 32, 8

    key = jax.random.PRNGKey(0)
    k_x, k_t, k_p = jax.random.split(key, 3)

    x_obs = jax.random.normal(k_x, (T, B, input_dim), jnp.float32)
    # monotonically increasing observation times
    t_obs = jnp.cumsum(
        jax.random.uniform(k_t, (T, B, 1), jnp.float32, 0.1, 1.0), axis=0)

    params = init_params(k_p, input_dim, hidden_dim, latent_dim)

    z0_mean, z0_log_var = rnn_encoder_forward(
        x_obs, t_obs, params, latent_dim=latent_dim)
    jax.block_until_ready((z0_mean, z0_log_var))

    assert z0_mean.shape == (B, latent_dim)
    assert z0_log_var.shape == (B, latent_dim)

    ref_mean, ref_log_var = _reference_forward(
        x_obs, t_obs, params, latent_dim=latent_dim)
    # bf16 W_hh on the recurrent matmul -> relaxed tolerance vs f32 reference.
    assert jnp.allclose(z0_mean, ref_mean, atol=2e-2, rtol=2e-2)
    assert jnp.allclose(z0_log_var, ref_log_var, atol=2e-2, rtol=2e-2)

    print("KERNEL_OK")
</pallas_src>

<mosaic_0001>
module attributes {stable_mosaic.version = 11 : i64} {
  func.func @_rnn_encoder_kernel(%arg0: memref<64x8xf32, #tpu.memory_space<vmem>>, %arg1: memref<8x384xf32, #tpu.memory_space<vmem>>, %arg2: memref<1x384xf32, #tpu.memory_space<vmem>>, %arg3: memref<128x384xbf16, #tpu.memory_space<vmem>>, %arg4: memref<1x128xf32, #tpu.memory_space<vmem>>, %arg5: memref<128x128xf32, #tpu.memory_space<vmem>>, %arg6: memref<1x128xf32, #tpu.memory_space<vmem>>, %arg7: memref<8x128xf32, #tpu.memory_space<vmem>>, %arg8: memref<64x384xf32, #tpu.memory_space<vmem>>) attributes {dimension_semantics = [], scalar_prefetch = 0 : i64, scratch_operands = 1 : i64, tpu.core_type = #tpu.core_type<tc>} {
    %c0 = arith.constant 0 : index
    %c0_0 = arith.constant 0 : index
    %0 = vector.load %arg0[%c0, %c0_0] : memref<64x8xf32, #tpu.memory_space<vmem>>, vector<64x8xf32>
    %c0_1 = arith.constant 0 : index
    %c0_2 = arith.constant 0 : index
    %1 = vector.load %arg1[%c0_1, %c0_2] : memref<8x384xf32, #tpu.memory_space<vmem>>, vector<8x384xf32>
    %cst = arith.constant dense<0.000000e+00> : vector<64x384xf32>
    %2 = tpu.matmul %0, %1, %cst {dimension_numbers = #tpu.dot_dimension_numbers<[1], [0], [0], [1], [0, 0, 1, 1], [], []>} : vector<64x8xf32>, vector<8x384xf32>, vector<64x384xf32> -> vector<64x384xf32>
    %c0_3 = arith.constant 0 : index
    %c0_4 = arith.constant 0 : index
    %3 = vector.load %arg2[%c0_3, %c0_4] : memref<1x384xf32, #tpu.memory_space<vmem>>, vector<1x384xf32>
    %4 = vector.broadcast %3 : vector<1x384xf32> to vector<64x384xf32>
    %5 = arith.addf %2, %4 : vector<64x384xf32>
    %c0_5 = arith.constant 0 : index
    %c0_6 = arith.constant 0 : index
    %6 = vector.load %arg8[%c0_5, %c0_6] : memref<64x384xf32, #tpu.memory_space<vmem>>, vector<64x384xf32>
    tpu.vector_store %arg8[%c0_5, %c0_6], %5 {strides = array<i32>} : memref<64x384xf32, #tpu.memory_space<vmem>>, vector<64x384xf32>,
    %c0_7 = arith.constant 0 : index
    %c0_8 = arith.constant 0 : index
    %7 = vector.load %arg3[%c0_7, %c0_8] : memref<128x384xbf16, #tpu.memory_space<vmem>>, vector<128x384xbf16>
    %c0_9 = arith.constant 0 : index
    %c0_10 = arith.constant 0 : index
    %8 = vector.load %arg4[%c0_9, %c0_10] : memref<1x128xf32, #tpu.memory_space<vmem>>, vector<1x128xf32>
    %9 = vector.shape_cast %8 : vector<1x128xf32> to vector<1x128xf32>
    %10 = vector.broadcast %9 : vector<1x128xf32> to vector<8x128xf32>
    %cst_11 = arith.constant 0.000000e+00 : f32
    %11 = vector.broadcast %cst_11 : f32 to vector<8x128xf32>
    %c0_i32 = arith.constant 0 : i32
    %c8_i32 = arith.constant 8 : i32
    %12 = arith.muli %c0_i32, %c8_i32 : i32
    %13 = tpu.assume_multiple %12, 8 : i32
    %14 = arith.index_cast %13 : i32 to index
    %c0_12 = arith.constant 0 : index
    %15 = vector.load %arg8[%14, %c0_12] : memref<64x384xf32, #tpu.memory_space<vmem>>, vector<8x384xf32>
    %16 = arith.truncf %11 : vector<8x128xf32> to vector<8x128xbf16>
    %cst_13 = arith.constant dense<0.000000e+00> : vector<8x384xf32>
    %17 = tpu.matmul %16, %7, %cst_13 {dimension_numbers = #tpu.dot_dimension_numbers<[1], [0], [0], [1], [0, 0, 1, 1], [], []>} : vector<8x128xbf16>, vector<128x384xbf16>, vector<8x384xf32> -> vector<8x384xf32>
    %18 = vector.extract_strided_slice %15 {offsets = [0, 0], sizes = [8, 128], strides = [1, 1]} : vector<8x384xf32> to vector<8x128xf32>
    %19 = vector.extract_strided_slice %17 {offsets = [0, 0], sizes = [8, 128], strides = [1, 1]} : vector<8x384xf32> to vector<8x128xf32>
    %20 = arith.addf %18, %19 : vector<8x128xf32>
    %21 = arith.negf %20 : vector<8x128xf32>
    %22 = math.exp %21 : vector<8x128xf32>
    %cst_14 = arith.constant 1.000000e+00 : f32
    %23 = vector.broadcast %cst_14 : f32 to vector<8x128xf32>
    %24 = arith.addf %23, %22 : vector<8x128xf32>
    %25 = arith.divf %23, %24 : vector<8x128xf32>
    %26 = vector.extract_strided_slice %15 {offsets = [0, 128], sizes = [8, 128], strides = [1, 1]} : vector<8x384xf32> to vector<8x128xf32>
    %27 = vector.extract_strided_slice %17 {offsets = [0, 128], sizes = [8, 128], strides = [1, 1]} : vector<8x384xf32> to vector<8x128xf32>
    %28 = arith.addf %26, %27 : vector<8x128xf32>
    %29 = arith.negf %28 : vector<8x128xf32>
    %30 = math.exp %29 : vector<8x128xf32>
    %cst_15 = arith.constant 1.000000e+00 : f32
    %31 = vector.broadcast %cst_15 : f32 to vector<8x128xf32>
    %32 = arith.addf %31, %30 : vector<8x128xf32>
    %33 = arith.divf %31, %32 : vector<8x128xf32>
    %34 = vector.extract_strided_slice %15 {offsets = [0, 256], sizes = [8, 128], strides = [1, 1]} : vector<8x384xf32> to vector<8x128xf32>
    %35 = vector.extract_strided_slice %17 {offsets = [0, 256], sizes = [8, 128], strides = [1, 1]} : vector<8x384xf32> to vector<8x128xf32>
    %36 = arith.addf %35, %10 : vector<8x128xf32>
    %37 = arith.mulf %25, %36 : vector<8x128xf32>
    %38 = arith.addf %34, %37 : vector<8x128xf32>
    %39 = math.tanh %38 : vector<8x128xf32>
    %cst_16 = arith.constant 1.000000e+00 : f32
    %40 = vector.broadcast %cst_16 : f32 to vector<8x128xf32>
    %41 = arith.subf %40, %33 : vector<8x128xf32>
    %42 = arith.mulf %41, %39 : vector<8x128xf32>
    %43 = arith.mulf %33, %11 : vector<8x128xf32>
    %44 = arith.addf %42, %43 : vector<8x128xf32>
    %c1_i32 = arith.constant 1 : i32
    %c8_i32_17 = arith.constant 8 : i32
    %45 = arith.muli %c1_i32, %c8_i32_17 : i32
    %46 = tpu.assume_multiple %45, 8 : i32
    %47 = arith.index_cast %46 : i32 to index
    %c0_18 = arith.constant 0 : index
    %48 = vector.load %arg8[%47, %c0_18] : memref<64x384xf32, #tpu.memory_space<vmem>>, vector<8x384xf32>
    %49 = arith.truncf %44 : vector<8x128xf32> to vector<8x128xbf16>
    %cst_19 = arith.constant dense<0.000000e+00> : vector<8x384xf32>
    %50 = tpu.matmul %49, %7, %cst_19 {dimension_numbers = #tpu.dot_dimension_numbers<[1], [0], [0], [1], [0, 0, 1, 1], [], []>} : vector<8x128xbf16>, vector<128x384xbf16>, vector<8x384xf32> -> vector<8x384xf32>
    %51 = vector.extract_strided_slice %48 {offsets = [0, 0], sizes = [8, 128], strides = [1, 1]} : vector<8x384xf32> to vector<8x128xf32>
    %52 = vector.extract_strided_slice %50 {offsets = [0, 0], sizes = [8, 128], strides = [1, 1]} : vector<8x384xf32> to vector<8x128xf32>
    %53 = arith.addf %51, %52 : vector<8x128xf32>
    %54 = arith.negf %53 : vector<8x128xf32>
    %55 = math.exp %54 : vector<8x128xf32>
    %cst_20 = arith.constant 1.000000e+00 : f32
    %56 = vector.broadcast %cst_20 : f32 to vector<8x128xf32>
    %57 = arith.addf %56, %55 : vector<8x128xf32>
    %58 = arith.divf %56, %57 : vector<8x128xf32>
    %59 = vector.extract_strided_slice %48 {offsets = [0, 128], sizes = [8, 128], strides = [1, 1]} : vector<8x384xf32> to vector<8x128xf32>
    %60 = vector.extract_strided_slice %50 {offsets = [0, 128], sizes = [8, 128], strides = [1, 1]} : vector<8x384xf32> to vector<8x128xf32>
    %61 = arith.addf %59, %60 : vector<8x128xf32>
    %62 = arith.negf %61 : vector<8x128xf32>
    %63 = math.exp %62 : vector<8x128xf32>
    %cst_21 = arith.constant 1.000000e+00 : f32
    %64 = vector.broadcast %cst_21 : f32 to vector<8x128xf32>
    %65 = arith.addf %64, %63 : vector<8x128xf32>
    %66 = arith.divf %64, %65 : vector<8x128xf32>
    %67 = vector.extract_strided_slice %48 {offsets = [0, 256], sizes = [8, 128], strides = [1, 1]} : vector<8x384xf32> to vector<8x128xf32>
    %68 = vector.extract_strided_slice %50 {offsets = [0, 256], sizes = [8, 128], strides = [1, 1]} : vector<8x384xf32> to vector<8x128xf32>
    %69 = arith.addf %68, %10 : vector<8x128xf32>
    %70 = arith.mulf %58, %69 : vector<8x128xf32>
    %71 = arith.addf %67, %70 : vector<8x128xf32>
    %72 = math.tanh %71 : vector<8x128xf32>
    %cst_22 = arith.constant 1.000000e+00 : f32
    %73 = vector.broadcast %cst_22 : f32 to vector<8x128xf32>
    %74 = arith.subf %73, %66 : vector<8x128xf32>
    %75 = arith.mulf %74, %72 : vector<8x128xf32>
    %76 = arith.mulf %66, %44 : vector<8x128xf32>
    %77 = arith.addf %75, %76 : vector<8x128xf32>
    %c2_i32 = arith.constant 2 : i32
    %c8_i32_23 = arith.constant 8 : i32
    %78 = arith.muli %c2_i32, %c8_i32_23 : i32
    %79 = tpu.assume_multiple %78, 8 : i32
    %80 = arith.index_cast %79 : i32 to index
    %c0_24 = arith.constant 0 : index
    %81 = vector.load %arg8[%80, %c0_24] : memref<64x384xf32, #tpu.memory_space<vmem>>, vector<8x384xf32>
    %82 = arith.truncf %77 : vector<8x128xf32> to vector<8x128xbf16>
    %cst_25 = arith.constant dense<0.000000e+00> : vector<8x384xf32>
    %83 = tpu.matmul %82, %7, %cst_25 {dimension_numbers = #tpu.dot_dimension_numbers<[1], [0], [0], [1], [0, 0, 1, 1], [], []>} : vector<8x128xbf16>, vector<128x384xbf16>, vector<8x384xf32> -> vector<8x384xf32>
    %84 = vector.extract_strided_slice %81 {offsets = [0, 0], sizes = [8, 128], strides = [1, 1]} : vector<8x384xf32> to vector<8x128xf32>
    %85 = vector.extract_strided_slice %83 {offsets = [0, 0], sizes = [8, 128], strides = [1, 1]} : vector<8x384xf32> to vector<8x128xf32>
    %86 = arith.addf %84, %85 : vector<8x128xf32>
    %87 = arith.negf %86 : vector<8x128xf32>
    %88 = math.exp %87 : vector<8x128xf32>
    %cst_26 = arith.constant 1.000000e+00 : f32
    %89 = vector.broadcast %cst_26 : f32 to vector<8x128xf32>
    %90 = arith.addf %89, %88 : vector<8x128xf32>
    %91 = arith.divf %89, %90 : vector<8x128xf32>
    %92 = vector.extract_strided_slice %81 {offsets = [0, 128], sizes = [8, 128], strides = [1, 1]} : vector<8x384xf32> to vector<8x128xf32>
    %93 = vector.extract_strided_slice %83 {offsets = [0, 128], sizes = [8, 128], strides = [1, 1]} : vector<8x384xf32> to vector<8x128xf32>
    %94 = arith.addf %92, %93 : vector<8x128xf32>
    %95 = arith.negf %94 : vector<8x128xf32>
    %96 = math.exp %95 : vector<8x128xf32>
    %cst_27 = arith.constant 1.000000e+00 : f32
    %97 = vector.broadcast %cst_27 : f32 to vector<8x128xf32>
    %98 = arith.addf %97, %96 : vector<8x128xf32>
    %99 = arith.divf %97, %98 : vector<8x128xf32>
    %100 = vector.extract_strided_slice %81 {offsets = [0, 256], sizes = [8, 128], strides = [1, 1]} : vector<8x384xf32> to vector<8x128xf32>
    %101 = vector.extract_strided_slice %83 {offsets = [0, 256], sizes = [8, 128], strides = [1, 1]} : vector<8x384xf32> to vector<8x128xf32>
    %102 = arith.addf %101, %10 : vector<8x128xf32>
    %103 = arith.mulf %91, %102 : vector<8x128xf32>
    %104 = arith.addf %100, %103 : vector<8x128xf32>
    %105 = math.tanh %104 : vector<8x128xf32>
    %cst_28 = arith.constant 1.000000e+00 : f32
    %106 = vector.broadcast %cst_28 : f32 to vector<8x128xf32>
    %107 = arith.subf %106, %99 : vector<8x128xf32>
    %108 = arith.mulf %107, %105 : vector<8x128xf32>
    %109 = arith.mulf %99, %77 : vector<8x128xf32>
    %110 = arith.addf %108, %109 : vector<8x128xf32>
    %c3_i32 = arith.constant 3 : i32
    %c8_i32_29 = arith.constant 8 : i32
    %111 = arith.muli %c3_i32, %c8_i32_29 : i32
    %112 = tpu.assume_multiple %111, 8 : i32
    %113 = arith.index_cast %112 : i32 to index
    %c0_30 = arith.constant 0 : index
    %114 = vector.load %arg8[%113, %c0_30] : memref<64x384xf32, #tpu.memory_space<vmem>>, vector<8x384xf32>
    %115 = arith.truncf %110 : vector<8x128xf32> to vector<8x128xbf16>
    %cst_31 = arith.constant dense<0.000000e+00> : vector<8x384xf32>
    %116 = tpu.matmul %115, %7, %cst_31 {dimension_numbers = #tpu.dot_dimension_numbers<[1], [0], [0], [1], [0, 0, 1, 1], [], []>} : vector<8x128xbf16>, vector<128x384xbf16>, vector<8x384xf32> -> vector<8x384xf32>
    %117 = vector.extract_strided_slice %114 {offsets = [0, 0], sizes = [8, 128], strides = [1, 1]} : vector<8x384xf32> to vector<8x128xf32>
    %118 = vector.extract_strided_slice %116 {offsets = [0, 0], sizes = [8, 128], strides = [1, 1]} : vector<8x384xf32> to vector<8x128xf32>
    %119 = arith.addf %117, %118 : vector<8x128xf32>
    %120 = arith.negf %119 : vector<8x128xf32>
    %121 = math.exp %120 : vector<8x128xf32>
    %cst_32 = arith.constant 1.000000e+00 : f32
    %122 = vector.broadcast %cst_32 : f32 to vector<8x128xf32>
    %123 = arith.addf %122, %121 : vector<8x128xf32>
    %124 = arith.divf %122, %123 : vector<8x128xf32>
    %125 = vector.extract_strided_slice %114 {offsets = [0, 128], sizes = [8, 128], strides = [1, 1]} : vector<8x384xf32> to vector<8x128xf32>
    %126 = vector.extract_strided_slice %116 {offsets = [0, 128], sizes = [8, 128], strides = [1, 1]} : vector<8x384xf32> to vector<8x128xf32>
    %127 = arith.addf %125, %126 : vector<8x128xf32>
    %128 = arith.negf %127 : vector<8x128xf32>
    %129 = math.exp %128 : vector<8x128xf32>
    %cst_33 = arith.constant 1.000000e+00 : f32
    %130 = vector.broadcast %cst_33 : f32 to vector<8x128xf32>
    %131 = arith.addf %130, %129 : vector<8x128xf32>
    %132 = arith.divf %130, %131 : vector<8x128xf32>
    %133 = vector.extract_strided_slice %114 {offsets = [0, 256], sizes = [8, 128], strides = [1, 1]} : vector<8x384xf32> to vector<8x128xf32>
    %134 = vector.extract_strided_slice %116 {offsets = [0, 256], sizes = [8, 128], strides = [1, 1]} : vector<8x384xf32> to vector<8x128xf32>
    %135 = arith.addf %134, %10 : vector<8x128xf32>
    %136 = arith.mulf %124, %135 : vector<8x128xf32>
    %137 = arith.addf %133, %136 : vector<8x128xf32>
    %138 = math.tanh %137 : vector<8x128xf32>
    %cst_34 = arith.constant 1.000000e+00 : f32
    %139 = vector.broadcast %cst_34 : f32 to vector<8x128xf32>
    %140 = arith.subf %139, %132 : vector<8x128xf32>
    %141 = arith.mulf %140, %138 : vector<8x128xf32>
    %142 = arith.mulf %132, %110 : vector<8x128xf32>
    %143 = arith.addf %141, %142 : vector<8x128xf32>
    %c4_i32 = arith.constant 4 : i32
    %c8_i32_35 = arith.constant 8 : i32
    %144 = arith.muli %c4_i32, %c8_i32_35 : i32
    %145 = tpu.assume_multiple %144, 8 : i32
    %146 = arith.index_cast %145 : i32 to index
    %c0_36 = arith.constant 0 : index
    %147 = vector.load %arg8[%146, %c0_36] : memref<64x384xf32, #tpu.memory_space<vmem>>, vector<8x384xf32>
    %148 = arith.truncf %143 : vector<8x128xf32> to vector<8x128xbf16>
    %cst_37 = arith.constant dense<0.000000e+00> : vector<8x384xf32>
    %149 = tpu.matmul %148, %7, %cst_37 {dimension_numbers = #tpu.dot_dimension_numbers<[1], [0], [0], [1], [0, 0, 1, 1], [], []>} : vector<8x128xbf16>, vector<128x384xbf16>, vector<8x384xf32> -> vector<8x384xf32>
    %150 = vector.extract_strided_slice %147 {offsets = [0, 0], sizes = [8, 128], strides = [1, 1]} : vector<8x384xf32> to vector<8x128xf32>
    %151 = vector.extract_strided_slice %149 {offsets = [0, 0], sizes = [8, 128], strides = [1, 1]} : vector<8x384xf32> to vector<8x128xf32>
    %152 = arith.addf %150, %151 : vector<8x128xf32>
    %153 = arith.negf %152 : vector<8x128xf32>
    %154 = math.exp %153 : vector<8x128xf32>
    %cst_38 = arith.constant 1.000000e+00 : f32
    %155 = vector.broadcast %cst_38 : f32 to vector<8x128xf32>
    %156 = arith.addf %155, %154 : vector<8x128xf32>
    %157 = arith.divf %155, %156 : vector<8x128xf32>
    %158 = vector.extract_strided_slice %147 {offsets = [0, 128], sizes = [8, 128], strides = [1, 1]} : vector<8x384xf32> to vector<8x128xf32>
    %159 = vector.extract_strided_slice %149 {offsets = [0, 128], sizes = [8, 128], strides = [1, 1]} : vector<8x384xf32> to vector<8x128xf32>
    %160 = arith.addf %158, %159 : vector<8x128xf32>
    %161 = arith.negf %160 : vector<8x128xf32>
    %162 = math.exp %161 : vector<8x128xf32>
    %cst_39 = arith.constant 1.000000e+00 : f32
    %163 = vector.broadcast %cst_39 : f32 to vector<8x128xf32>
    %164 = arith.addf %163, %162 : vector<8x128xf32>
    %165 = arith.divf %163, %164 : vector<8x128xf32>
    %166 = vector.extract_strided_slice %147 {offsets = [0, 256], sizes = [8, 128], strides = [1, 1]} : vector<8x384xf32> to vector<8x128xf32>
    %167 = vector.extract_strided_slice %149 {offsets = [0, 256], sizes = [8, 128], strides = [1, 1]} : vector<8x384xf32> to vector<8x128xf32>
    %168 = arith.addf %167, %10 : vector<8x128xf32>
    %169 = arith.mulf %157, %168 : vector<8x128xf32>
    %170 = arith.addf %166, %169 : vector<8x128xf32>
    %171 = math.tanh %170 : vector<8x128xf32>
    %cst_40 = arith.constant 1.000000e+00 : f32
    %172 = vector.broadcast %cst_40 : f32 to vector<8x128xf32>
    %173 = arith.subf %172, %165 : vector<8x128xf32>
    %174 = arith.mulf %173, %171 : vector<8x128xf32>
    %175 = arith.mulf %165, %143 : vector<8x128xf32>
    %176 = arith.addf %174, %175 : vector<8x128xf32>
    %c5_i32 = arith.constant 5 : i32
    %c8_i32_41 = arith.constant 8 : i32
    %177 = arith.muli %c5_i32, %c8_i32_41 : i32
    %178 = tpu.assume_multiple %177, 8 : i32
    %179 = arith.index_cast %178 : i32 to index
    %c0_42 = arith.constant 0 : index
    %180 = vector.load %arg8[%179, %c0_42] : memref<64x384xf32, #tpu.memory_space<vmem>>, vector<8x384xf32>
    %181 = arith.truncf %176 : vector<8x128xf32> to vector<8x128xbf16>
    %cst_43 = arith.constant dense<0.000000e+00> : vector<8x384xf32>
    %182 = tpu.matmul %181, %7, %cst_43 {dimension_numbers = #tpu.dot_dimension_numbers<[1], [0], [0], [1], [0, 0, 1, 1], [], []>} : vector<8x128xbf16>, vector<128x384xbf16>, vector<8x384xf32> -> vector<8x384xf32>
    %183 = vector.extract_strided_slice %180 {offsets = [0, 0], sizes = [8, 128], strides = [1, 1]} : vector<8x384xf32> to vector<8x128xf32>
    %184 = vector.extract_strided_slice %182 {offsets = [0, 0], sizes = [8, 128], strides = [1, 1]} : vector<8x384xf32> to vector<8x128xf32>
    %185 = arith.addf %183, %184 : vector<8x128xf32>
    %186 = arith.negf %185 : vector<8x128xf32>
    %187 = math.exp %186 : vector<8x128xf32>
    %cst_44 = arith.constant 1.000000e+00 : f32
    %188 = vector.broadcast %cst_44 : f32 to vector<8x128xf32>
    %189 = arith.addf %188, %187 : vector<8x128xf32>
    %190 = arith.divf %188, %189 : vector<8x128xf32>
    %191 = vector.extract_strided_slice %180 {offsets = [0, 128], sizes = [8, 128], strides = [1, 1]} : vector<8x384xf32> to vector<8x128xf32>
    %192 = vector.extract_strided_slice %182 {offsets = [0, 128], sizes = [8, 128], strides = [1, 1]} : vector<8x384xf32> to vector<8x128xf32>
    %193 = arith.addf %191, %192 : vector<8x128xf32>
    %194 = arith.negf %193 : vector<8x128xf32>
    %195 = math.exp %194 : vector<8x128xf32>
    %cst_45 = arith.constant 1.000000e+00 : f32
    %196 = vector.broadcast %cst_45 : f32 to vector<8x128xf32>
    %197 = arith.addf %196, %195 : vector<8x128xf32>
    %198 = arith.divf %196, %197 : vector<8x128xf32>
    %199 = vector.extract_strided_slice %180 {offsets = [0, 256], sizes = [8, 128], strides = [1, 1]} : vector<8x384xf32> to vector<8x128xf32>
    %200 = vector.extract_strided_slice %182 {offsets = [0, 256], sizes = [8, 128], strides = [1, 1]} : vector<8x384xf32> to vector<8x128xf32>
    %201 = arith.addf %200, %10 : vector<8x128xf32>
    %202 = arith.mulf %190, %201 : vector<8x128xf32>
    %203 = arith.addf %199, %202 : vector<8x128xf32>
    %204 = math.tanh %203 : vector<8x128xf32>
    %cst_46 = arith.constant 1.000000e+00 : f32
    %205 = vector.broadcast %cst_46 : f32 to vector<8x128xf32>
    %206 = arith.subf %205, %198 : vector<8x128xf32>
    %207 = arith.mulf %206, %204 : vector<8x128xf32>
    %208 = arith.mulf %198, %176 : vector<8x128xf32>
    %209 = arith.addf %207, %208 : vector<8x128xf32>
    %c6_i32 = arith.constant 6 : i32
    %c8_i32_47 = arith.constant 8 : i32
    %210 = arith.muli %c6_i32, %c8_i32_47 : i32
    %211 = tpu.assume_multiple %210, 8 : i32
    %212 = arith.index_cast %211 : i32 to index
    %c0_48 = arith.constant 0 : index
    %213 = vector.load %arg8[%212, %c0_48] : memref<64x384xf32, #tpu.memory_space<vmem>>, vector<8x384xf32>
    %214 = arith.truncf %209 : vector<8x128xf32> to vector<8x128xbf16>
    %cst_49 = arith.constant dense<0.000000e+00> : vector<8x384xf32>
    %215 = tpu.matmul %214, %7, %cst_49 {dimension_numbers = #tpu.dot_dimension_numbers<[1], [0], [0], [1], [0, 0, 1, 1], [], []>} : vector<8x128xbf16>, vector<128x384xbf16>, vector<8x384xf32> -> vector<8x384xf32>
    %216 = vector.extract_strided_slice %213 {offsets = [0, 0], sizes = [8, 128], strides = [1, 1]} : vector<8x384xf32> to vector<8x128xf32>
    %217 = vector.extract_strided_slice %215 {offsets = [0, 0], sizes = [8, 128], strides = [1, 1]} : vector<8x384xf32> to vector<8x128xf32>
    %218 = arith.addf %216, %217 : vector<8x128xf32>
    %219 = arith.negf %218 : vector<8x128xf32>
    %220 = math.exp %219 : vector<8x128xf32>
    %cst_50 = arith.constant 1.000000e+00 : f32
    %221 = vector.broadcast %cst_50 : f32 to vector<8x128xf32>
    %222 = arith.addf %221, %220 : vector<8x128xf32>
    %223 = arith.divf %221, %222 : vector<8x128xf32>
    %224 = vector.extract_strided_slice %213 {offsets = [0, 128], sizes = [8, 128], strides = [1, 1]} : vector<8x384xf32> to vector<8x128xf32>
    %225 = vector.extract_strided_slice %215 {offsets = [0, 128], sizes = [8, 128], strides = [1, 1]} : vector<8x384xf32> to vector<8x128xf32>
    %226 = arith.addf %224, %225 : vector<8x128xf32>
    %227 = arith.negf %226 : vector<8x128xf32>
    %228 = math.exp %227 : vector<8x128xf32>
    %cst_51 = arith.constant 1.000000e+00 : f32
    %229 = vector.broadcast %cst_51 : f32 to vector<8x128xf32>
    %230 = arith.addf %229, %228 : vector<8x128xf32>
    %231 = arith.divf %229, %230 : vector<8x128xf32>
    %232 = vector.extract_strided_slice %213 {offsets = [0, 256], sizes = [8, 128], strides = [1, 1]} : vector<8x384xf32> to vector<8x128xf32>
    %233 = vector.extract_strided_slice %215 {offsets = [0, 256], sizes = [8, 128], strides = [1, 1]} : vector<8x384xf32> to vector<8x128xf32>
    %234 = arith.addf %233, %10 : vector<8x128xf32>
    %235 = arith.mulf %223, %234 : vector<8x128xf32>
    %236 = arith.addf %232, %235 : vector<8x128xf32>
    %237 = math.tanh %236 : vector<8x128xf32>
    %cst_52 = arith.constant 1.000000e+00 : f32
    %238 = vector.broadcast %cst_52 : f32 to vector<8x128xf32>
    %239 = arith.subf %238, %231 : vector<8x128xf32>
    %240 = arith.mulf %239, %237 : vector<8x128xf32>
    %241 = arith.mulf %231, %209 : vector<8x128xf32>
    %242 = arith.addf %240, %241 : vector<8x128xf32>
    %c7_i32 = arith.constant 7 : i32
    %c8_i32_53 = arith.constant 8 : i32
    %243 = arith.muli %c7_i32, %c8_i32_53 : i32
    %244 = tpu.assume_multiple %243, 8 : i32
    %245 = arith.index_cast %244 : i32 to index
    %c0_54 = arith.constant 0 : index
    %246 = vector.load %arg8[%245, %c0_54] : memref<64x384xf32, #tpu.memory_space<vmem>>, vector<8x384xf32>
    %247 = arith.truncf %242 : vector<8x128xf32> to vector<8x128xbf16>
    %cst_55 = arith.constant dense<0.000000e+00> : vector<8x384xf32>
    %248 = tpu.matmul %247, %7, %cst_55 {dimension_numbers = #tpu.dot_dimension_numbers<[1], [0], [0], [1], [0, 0, 1, 1], [], []>} : vector<8x128xbf16>, vector<128x384xbf16>, vector<8x384xf32> -> vector<8x384xf32>
    %249 = vector.extract_strided_slice %246 {offsets = [0, 0], sizes = [8, 128], strides = [1, 1]} : vector<8x384xf32> to vector<8x128xf32>
    %250 = vector.extract_strided_slice %248 {offsets = [0, 0], sizes = [8, 128], strides = [1, 1]} : vector<8x384xf32> to vector<8x128xf32>
    %251 = arith.addf %249, %250 : vector<8x128xf32>
    %252 = arith.negf %251 : vector<8x128xf32>
    %253 = math.exp %252 : vector<8x128xf32>
    %cst_56 = arith.constant 1.000000e+00 : f32
    %254 = vector.broadcast %cst_56 : f32 to vector<8x128xf32>
    %255 = arith.addf %254, %253 : vector<8x128xf32>
    %256 = arith.divf %254, %255 : vector<8x128xf32>
    %257 = vector.extract_strided_slice %246 {offsets = [0, 128], sizes = [8, 128], strides = [1, 1]} : vector<8x384xf32> to vector<8x128xf32>
    %258 = vector.extract_strided_slice %248 {offsets = [0, 128], sizes = [8, 128], strides = [1, 1]} : vector<8x384xf32> to vector<8x128xf32>
    %259 = arith.addf %257, %258 : vector<8x128xf32>
    %260 = arith.negf %259 : vector<8x128xf32>
    %261 = math.exp %260 : vector<8x128xf32>
    %cst_57 = arith.constant 1.000000e+00 : f32
    %262 = vector.broadcast %cst_57 : f32 to vector<8x128xf32>
    %263 = arith.addf %262, %261 : vector<8x128xf32>
    %264 = arith.divf %262, %263 : vector<8x128xf32>
    %265 = vector.extract_strided_slice %246 {offsets = [0, 256], sizes = [8, 128], strides = [1, 1]} : vector<8x384xf32> to vector<8x128xf32>
    %266 = vector.extract_strided_slice %248 {offsets = [0, 256], sizes = [8, 128], strides = [1, 1]} : vector<8x384xf32> to vector<8x128xf32>
    %267 = arith.addf %266, %10 : vector<8x128xf32>
    %268 = arith.mulf %256, %267 : vector<8x128xf32>
    %269 = arith.addf %265, %268 : vector<8x128xf32>
    %270 = math.tanh %269 : vector<8x128xf32>
    %cst_58 = arith.constant 1.000000e+00 : f32
    %271 = vector.broadcast %cst_58 : f32 to vector<8x128xf32>
    %272 = arith.subf %271, %264 : vector<8x128xf32>
    %273 = arith.mulf %272, %270 : vector<8x128xf32>
    %274 = arith.mulf %264, %242 : vector<8x128xf32>
    %275 = arith.addf %273, %274 : vector<8x128xf32>
    %c8_i32_59 = arith.constant 8 : i32
    %cst_60 = arith.constant 0.000000e+00 : f32
    %276 = vector.broadcast %cst_60 : f32 to vector<8x128xf32>
    %277 = arith.cmpf ogt, %275, %276 : vector<8x128xf32>
    %cst_61 = arith.constant 1.000000e-01 : f32
    %278 = vector.broadcast %cst_61 : f32 to vector<8x128xf32>
    %279 = arith.mulf %278, %275 : vector<8x128xf32>
    %280 = arith.select %277, %275, %279 : vector<8x128xi1>, vector<8x128xf32>
    %c0_62 = arith.constant 0 : index
    %c0_63 = arith.constant 0 : index
    %281 = vector.load %arg5[%c0_62, %c0_63] : memref<128x128xf32, #tpu.memory_space<vmem>>, vector<128x128xf32>
    %cst_64 = arith.constant dense<0.000000e+00> : vector<8x128xf32>
    %282 = tpu.matmul %280, %281, %cst_64 {dimension_numbers = #tpu.dot_dimension_numbers<[1], [0], [0], [1], [0, 0, 1, 1], [], []>} : vector<8x128xf32>, vector<128x128xf32>, vector<8x128xf32> -> vector<8x128xf32>
    %c0_65 = arith.constant 0 : index
    %c0_66 = arith.constant 0 : index
    %283 = vector.load %arg6[%c0_65, %c0_66] : memref<1x128xf32, #tpu.memory_space<vmem>>, vector<1x128xf32>
    %284 = vector.broadcast %283 : vector<1x128xf32> to vector<8x128xf32>
    %285 = arith.addf %282, %284 : vector<8x128xf32>
    %c0_67 = arith.constant 0 : index
    %c0_68 = arith.constant 0 : index
    %286 = vector.load %arg7[%c0_67, %c0_68] : memref<8x128xf32, #tpu.memory_space<vmem>>, vector<8x128xf32>
    tpu.vector_store %arg7[%c0_67, %c0_68], %285 {strides = array<i32>} : memref<8x128xf32, #tpu.memory_space<vmem>>, vector<8x128xf32>,
    return
  }
}

</mosaic_0001>

<llo_original>
// kernel: tpu_custom_call.1
$region0: #{tpu_custom_call.1}
  #allocation0 [shape = 'u32[]', space=smem, size = 0x4, offset = 0x4, fixed_abs, tag = 'smem constant byte address 0x4 - core index']
  #allocation1 [shape = 'u32[144,128]{1,0:T(1,128)}', space=vmem, size = 0x12000, scoped, tag = 'internal scratch']
  #allocation2 [shape = 'f32[64,384]{1,0:T(8,128)}', space=vmem, size = 0x18000, scoped, tag = 'scratch operand']
  %s0 = inlined_call_operand.vmem [shape: f32[64,8], index: 0, kind: input, shape index: {}]
  %s1 = inlined_call_operand.vmem [shape: f32[8,384], index: 1, kind: input, shape index: {}]
  %s2 = inlined_call_operand.vmem [shape: f32[1,384], index: 2, kind: input, shape index: {}]
  %s3 = inlined_call_operand.hbm [shape: bf16[128,384], index: 3, kind: input, shape index: {}]
  %s4 = inlined_call_operand.vmem [shape: f32[1,128], index: 4, kind: input, shape index: {}]
  %s5 = inlined_call_operand.hbm [shape: f32[128,128], index: 5, kind: input, shape index: {}]
  %s6 = inlined_call_operand.vmem [shape: f32[1,128], index: 6, kind: input, shape index: {}]
  %s7 = inlined_call_operand.hbm [shape: f32[8,128], index: 7, kind: output, shape index: {}]
  %s8 = sld [smem:[#allocation0]]
  $region46: #{tpu_custom_call.1} parent=0
    _
  %s10 = ssub.s32 1, %s8
  %s11 = scalar_select 0, %s10, %s8
  $region1: #{tpu_custom_call.1} parent=0
    #allocation3 [shape = 'u8[98304]{0}', space=vmem, size = 0x18000, scoped, tag = 'input window, operand 3, single buffered']
    #allocation4 [shape = 's32[1]{0}', space=sflag, size = 0x4, scoped, tag = 'scoped memory for tpu_custom_call.1']
    #allocation5 [shape = 's32[1]{0}', space=sflag, size = 0x4, scoped, tag = 'scoped memory for tpu_custom_call.1']
    #allocation6 [shape = 'u8[65536]{0}', space=vmem, size = 0x10000, scoped, tag = 'input window, operand 5, single buffered']
    #allocation7 [shape = 's32[1]{0}', space=sflag, size = 0x4, scoped, tag = 'scoped memory for tpu_custom_call.1']
    #allocation8 [shape = 'u8[4096]{0}', space=vmem, size = 0x1000, scoped, tag = 'output window, operand 0, single buffered']
    %12 = vsyncpa [#allocation4], 0
    %13 = vsyncpa [#allocation7], 0
    %14 = vsyncpa [#allocation5], 0
    // Predicated region
    $region2: #{tpu_custom_call.1} parent=1 // pred_check
      _
    $region3: #{tpu_custom_call.1} parent=1 // pred_check_branch
      %16 = sbr.rel (0) target = $region5
    $region4: #{tpu_custom_call.1} parent=1 // pred_region
      _
    $region5: #{tpu_custom_call.1} parent=1 // pred_fallthru
      _
    // Predicated region
    $region6: #{tpu_custom_call.1} parent=1 // pred_check
      _
    $region7: #{tpu_custom_call.1} parent=1 // pred_check_branch
      %18 = sbr.rel (0) target = $region9
    $region8: #{tpu_custom_call.1} parent=1 // pred_region
      _
    $region9: #{tpu_custom_call.1} parent=1 // pred_fallthru
      _
    // Predicated region
    $region10: #{tpu_custom_call.1} parent=1 // pred_check
      _
    $region11: #{tpu_custom_call.1} parent=1 // pred_check_branch
      %20 = sbr.rel (0) target = $region13
    $region12: #{tpu_custom_call.1} parent=1 // pred_region
      _
    $region13: #{tpu_custom_call.1} parent=1 // pred_fallthru
      _
    // Predicated region
    $region14: #{tpu_custom_call.1} parent=1 // pred_check
      _
    $region15: #{tpu_custom_call.1} parent=1 // pred_check_branch
      %22 = sbr.rel (0) target = $region17
    $region16: #{tpu_custom_call.1} parent=1 // pred_region
      %s24 = ssub.s32 3072, 3072
      %25 = vsyncadd [#allocation4], %s24
      %s26 = sshll.u32 [#allocation3], 4
      %s27 = int_to_ptr.vmem [resolvable:$true] %s26
      %32 = dma.hbm_to_vmem [thread:$0]  %s3, 3072, %s27, [#allocation4], 192, 192, 12
    $region17: #{tpu_custom_call.1} parent=1 // pred_fallthru
      _
    // Predicated region
    $region18: #{tpu_custom_call.1} parent=1 // pred_check
      _
    $region19: #{tpu_custom_call.1} parent=1 // pred_check_branch
      %34 = sbr.rel (0) target = $region21
    $region20: #{tpu_custom_call.1} parent=1 // pred_region
      _
    $region21: #{tpu_custom_call.1} parent=1 // pred_fallthru
      _
    // Predicated region
    $region22: #{tpu_custom_call.1} parent=1 // pred_check
      _
    $region23: #{tpu_custom_call.1} parent=1 // pred_check_branch
      %36 = sbr.rel (0) target = $region25
    $region24: #{tpu_custom_call.1} parent=1 // pred_region
      %s38 = ssub.s32 2048, 2048
      %39 = vsyncadd [#allocation7], %s38
      %s40 = sshll.u32 [#allocation6], 4
      %s41 = int_to_ptr.vmem [resolvable:$true] %s40
      %46 = dma.hbm_to_vmem [thread:$0]  %s5, 2048, %s41, [#allocation7], 128, 128, 8
    $region25: #{tpu_custom_call.1} parent=1 // pred_fallthru
      _
    // Predicated region
    $region26: #{tpu_custom_call.1} parent=1 // pred_check
      _
    $region27: #{tpu_custom_call.1} parent=1 // pred_check_branch
      %48 = sbr.rel (0) target = $region29
    $region28: #{tpu_custom_call.1} parent=1 // pred_region
      _
    $region29: #{tpu_custom_call.1} parent=1 // pred_fallthru
      _
    // Predicated region
    $region30: #{tpu_custom_call.1} parent=1 // pred_check
      _
    $region31: #{tpu_custom_call.1} parent=1 // pred_check_branch
      %50 = sbr.rel (0) target = $region33
    $region32: #{tpu_custom_call.1} parent=1 // pred_region
      %51 = dma.done [#allocation4], 3072
    $region33: #{tpu_custom_call.1} parent=1 // pred_fallthru
      _
    // Predicated region
    $region34: #{tpu_custom_call.1} parent=1 // pred_check
      _
    $region35: #{tpu_custom_call.1} parent=1 // pred_check_branch
      %53 = sbr.rel (0) target = $region37
    $region36: #{tpu_custom_call.1} parent=1 // pred_region
      %54 = dma.done [#allocation7], 2048
    $region37: #{tpu_custom_call.1} parent=1 // pred_fallthru
      _
    %v56 = vld [vmem:[%s0] sm:$0xff]
    %v57 = vld [vmem:[%s0 + $0x8] sm:$0xff]
    %v58 = vld [vmem:[%s0 + $0x10] sm:$0xff]
    %v59 = vld [vmem:[%s0 + $0x18] sm:$0xff]
    %v60 = vld [vmem:[%s0 + $0x20] sm:$0xff]
    %v61 = vld [vmem:[%s0 + $0x28] sm:$0xff]
    %v62 = vld [vmem:[%s0 + $0x30] sm:$0xff]
    %v63 = vld [vmem:[%s0 + $0x38] sm:$0xff]
    %v64 = vld [vmem:[%s1] sm:$0xff]
    %v65 = vld [vmem:[%s1 + $0x8] sm:$0xff]
    %v66 = vld [vmem:[%s1 + $0x10] sm:$0xff]
    %v67 = vld [vmem:[%s2] sm:$0x7]
    %v69 = vlaneseq
    %v70 = vshrl.u32 %v69, 7
    %v71 = vsub.s32 0, %v70
    %v72 = vrot.slane %v67, %v71
    %v73 = vlaneseq
    %v74 = vshrl.u32 %v73, 7
    %v75 = vsub.s32 1, %v74
    %v76 = vrot.slane %v67, %v75
    %v77 = vlaneseq
    %v78 = vshrl.u32 %v77, 7
    %v79 = vsub.s32 2, %v78
    %v80 = vrot.slane %v67, %v79
    %vm84 = vcmask 64512
    %v86 = vsel %vm84, %v56, 0
    %v89 = vsel %vm84, %v57, 0
    %v92 = vsel %vm84, %v58, 0
    %v95 = vsel %vm84, %v59, 0
    %v98 = vsel %vm84, %v60, 0
    %v101 = vsel %vm84, %v61, 0
    %v104 = vsel %vm84, %v62, 0
    %v107 = vsel %vm84, %v63, 0
    %109 = vmatprep.subr.mxu0 0.0
    %110 = vmatpush1.msra.mxu0 0.0
    %111 = vmatprep.subr.mxu0 0.0
    %112 = vmatpush1.msra.mxu0 0.0
    %113 = vmatprep.subr.mxu0 0.0
    %114 = vmatpush1.msra.mxu0 0.0
    %115 = vmatprep.subr.mxu0 0.0
    %116 = vmatpush1.msra.mxu0 0.0
    %117 = vmatprep.subr.mxu0 0.0
    %118 = vmatpush1.msra.mxu0 0.0
    %119 = vmatprep.subr.mxu0 0.0
    %120 = vmatpush1.msra.mxu0 0.0
    %121 = vmatprep.subr.mxu0 0.0
    %122 = vmatpush1.msra.mxu0 0.0
    %123 = vmatprep.subr.mxu0 0.0
    %124 = vmatpush1.msra.mxu0 0.0
    %125 = vmatprep.subr.mxu0 0.0
    %126 = vmatpush1.msra.mxu0 0.0
    %127 = vmatprep.subr.mxu0 0.0
    %128 = vmatpush1.msra.mxu0 0.0
    %129 = vmatprep.subr.mxu0 0.0
    %130 = vmatpush1.msra.mxu0 0.0
    %131 = vmatprep.subr.mxu0 0.0
    %132 = vmatpush1.msra.mxu0 0.0
    %133 = vmatprep.subr.mxu0 0.0
    %134 = vmatpush1.msra.mxu0 0.0
    %135 = vmatprep.subr.mxu0 0.0
    %136 = vmatpush1.msra.mxu0 0.0
    %137 = vmatprep.subr.mxu0 0.0
    %138 = vmatpush1.msra.mxu0 0.0
    %139 = vmatprep.subr.mxu0 %v65
    %140 = vmatpush1.msra.mxu0 %v64
    %141 = vmatprep.subr.mxu0 0.0
    %142 = vmatpush2.msra.mxu0 0.0
    %143 = vmatprep.subr.mxu0 0.0
    %144 = vmatpush2.msra.mxu0 0.0
    %145 = vmatprep.subr.mxu0 0.0
    %146 = vmatpush2.msra.mxu0 0.0
    %147 = vmatprep.subr.mxu0 0.0
    %148 = vmatpush2.msra.mxu0 0.0
    %149 = vmatprep.subr.mxu0 0.0
    %150 = vmatpush2.msra.mxu0 0.0
    %151 = vmatprep.subr.mxu0 0.0
    %152 = vmatpush2.msra.mxu0 0.0
    %153 = vmatprep.subr.mxu0 0.0
    %154 = vmatpush2.msra.mxu0 0.0
    %155 = vmatprep.subr.mxu0 0.0
    %156 = vmatpush2.msra.mxu0 0.0
    %157 = vmatprep.subr.mxu0 0.0
    %158 = vmatpush2.msra.mxu0 0.0
    %159 = vmatprep.subr.mxu0 0.0
    %160 = vmatpush2.msra.mxu0 0.0
    %161 = vmatprep.subr.mxu0 0.0
    %162 = vmatpush2.msra.mxu0 0.0
    %163 = vmatprep.subr.mxu0 0.0
    %164 = vmatpush2.msra.mxu0 0.0
    %165 = vmatprep.subr.mxu0 0.0
    %166 = vmatpush2.msra.mxu0 0.0
    %167 = vmatprep.subr.mxu0 0.0
    %168 = vmatpush2.msra.mxu0 0.0
    %169 = vmatprep.subr.mxu0 0.0
    %170 = vmatpush2.msra.mxu0 0.0
    %171 = vmatprep.subr.mxu0 0.0
    %172 = vmatpush2.msra.mxu0 0.0
    %173 = vmatprep.mubr.f32.mxu0 0.0
    %174 = vmatmul.mubr.f32.gmra.mxu0 %v86
    %v175 = vpop.f32.mrf.mxu0
    %v176 = vadd.f32 %v72, %v175
    %v177 = vpop.f32.mrf.mxu0
    %v178 = vadd.f32 %v76, %v177
    %179 = vmatprep.mubr.f32.mxu0 0.0
    %180 = vmatmul.mubr.f32.gmra.mxu0 %v89
    %v181 = vpop.f32.mrf.mxu0
    %v182 = vadd.f32 %v72, %v181
    %v183 = vpop.f32.mrf.mxu0
    %v184 = vadd.f32 %v76, %v183
    %185 = vmatprep.mubr.f32.mxu0 0.0
    %186 = vmatmul.mubr.f32.gmra.mxu0 %v92
    %v187 = vpop.f32.mrf.mxu0
    %v188 = vadd.f32 %v72, %v187
    %v189 = vpop.f32.mrf.mxu0
    %v190 = vadd.f32 %v76, %v189
    %191 = vmatprep.mubr.f32.mxu0 0.0
    %192 = vmatmul.mubr.f32.gmra.mxu0 %v95
    %v193 = vpop.f32.mrf.mxu0
    %v194 = vadd.f32 %v72, %v193
    %v195 = vpop.f32.mrf.mxu0
    %v196 = vadd.f32 %v76, %v195
    %197 = vmatprep.mubr.f32.mxu0 0.0
    %198 = vmatmul.mubr.f32.gmra.mxu0 %v98
    %v199 = vpop.f32.mrf.mxu0
    %v200 = vadd.f32 %v72, %v199
    %v201 = vpop.f32.mrf.mxu0
    %v202 = vadd.f32 %v76, %v201
    %203 = vmatprep.mubr.f32.mxu0 0.0
    %204 = vmatmul.mubr.f32.gmra.mxu0 %v101
    %v205 = vpop.f32.mrf.mxu0
    %v206 = vadd.f32 %v72, %v205
    %v207 = vpop.f32.mrf.mxu0
    %v208 = vadd.f32 %v76, %v207
    %209 = vmatprep.mubr.f32.mxu0 0.0
    %210 = vmatmul.mubr.f32.gmra.mxu0 %v104
    %v211 = vpop.f32.mrf.mxu0
    %v212 = vadd.f32 %v72, %v211
    %v213 = vpop.f32.mrf.mxu0
    %v214 = vadd.f32 %v76, %v213
    %215 = vmatprep.mubr.f32.mxu0 0.0
    %216 = vmatmul.mubr.f32.gmra.mxu0 %v107
    %v217 = vpop.f32.mrf.mxu0
    %v218 = vadd.f32 %v72, %v217
    %v219 = vpop.f32.mrf.mxu0
    %v220 = vadd.f32 %v76, %v219
    %221 = vdwg.mxu0
    %222 = vmatprep.subr.mxu0 0.0
    %223 = vmatpush1.msra.mxu0 0.0
    %224 = vmatprep.subr.mxu0 0.0
    %225 = vmatpush1.msra.mxu0 0.0
    %226 = vmatprep.subr.mxu0 0.0
    %227 = vmatpush1.msra.mxu0 0.0
    %228 = vmatprep.subr.mxu0 0.0
    %229 = vmatpush1.msra.mxu0 0.0
    %230 = vmatprep.subr.mxu0 0.0
    %231 = vmatpush1.msra.mxu0 0.0
    %232 = vmatprep.subr.mxu0 0.0
    %233 = vmatpush1.msra.mxu0 0.0
    %234 = vmatprep.subr.mxu0 0.0
    %235 = vmatpush1.msra.mxu0 0.0
    %236 = vmatprep.subr.mxu0 0.0
    %237 = vmatpush1.msra.mxu0 0.0
    %238 = vmatprep.subr.mxu0 0.0
    %239 = vmatpush1.msra.mxu0 0.0
    %240 = vmatprep.subr.mxu0 0.0
    %241 = vmatpush1.msra.mxu0 0.0
    %242 = vmatprep.subr.mxu0 0.0
    %243 = vmatpush1.msra.mxu0 0.0
    %244 = vmatprep.subr.mxu0 0.0
    %245 = vmatpush1.msra.mxu0 0.0
    %246 = vmatprep.subr.mxu0 0.0
    %247 = vmatpush1.msra.mxu0 0.0
    %248 = vmatprep.subr.mxu0 0.0
    %249 = vmatpush1.msra.mxu0 0.0
    %250 = vmatprep.subr.mxu0 0.0
    %251 = vmatpush1.msra.mxu0 0.0
    %252 = vmatprep.subr.mxu0 0.0
    %253 = vmatpush1.msra.mxu0 %v66
    %254 = vmatprep.subr.mxu0 0.0
    %255 = vmatpush2.msra.mxu0 0.0
    %256 = vmatprep.subr.mxu0 0.0
    %257 = vmatpush2.msra.mxu0 0.0
    %258 = vmatprep.subr.mxu0 0.0
    %259 = vmatpush2.msra.mxu0 0.0
    %260 = vmatprep.subr.mxu0 0.0
    %261 = vmatpush2.msra.mxu0 0.0
    %262 = vmatprep.subr.mxu0 0.0
    %263 = vmatpush2.msra.mxu0 0.0
    %264 = vmatprep.subr.mxu0 0.0
    %265 = vmatpush2.msra.mxu0 0.0
    %266 = vmatprep.subr.mxu0 0.0
    %267 = vmatpush2.msra.mxu0 0.0
    %268 = vmatprep.subr.mxu0 0.0
    %269 = vmatpush2.msra.mxu0 0.0
    %270 = vmatprep.subr.mxu0 0.0
    %271 = vmatpush2.msra.mxu0 0.0
    %272 = vmatprep.subr.mxu0 0.0
    %273 = vmatpush2.msra.mxu0 0.0
    %274 = vmatprep.subr.mxu0 0.0
    %275 = vmatpush2.msra.mxu0 0.0
    %276 = vmatprep.subr.mxu0 0.0
    %277 = vmatpush2.msra.mxu0 0.0
    %278 = vmatprep.subr.mxu0 0.0
    %279 = vmatpush2.msra.mxu0 0.0
    %280 = vmatprep.subr.mxu0 0.0
    %281 = vmatpush2.msra.mxu0 0.0
    %282 = vmatprep.subr.mxu0 0.0
    %283 = vmatpush2.msra.mxu0 0.0
    %284 = vmatprep.subr.mxu0 0.0
    %285 = vmatpush2.msra.mxu0 0.0
    %286 = vmatprep.mubr.f32.mxu0 0.0
    %287 = vmatmul.mubr.f32.gmra.mxu0 %v86
    %v288 = vpop.f32.mrf.mxu0
    %v289 = vadd.f32 %v80, %v288
    %v290 = vpop.f32.mrf.mxu0
    %291 = vmatprep.mubr.f32.mxu0 0.0
    %292 = vmatmul.mubr.f32.gmra.mxu0 %v89
    %v293 = vpop.f32.mrf.mxu0
    %v294 = vadd.f32 %v80, %v293
    %v295 = vpop.f32.mrf.mxu0
    %296 = vmatprep.mubr.f32.mxu0 0.0
    %297 = vmatmul.mubr.f32.gmra.mxu0 %v92
    %v298 = vpop.f32.mrf.mxu0
    %v299 = vadd.f32 %v80, %v298
    %v300 = vpop.f32.mrf.mxu0
    %301 = vmatprep.mubr.f32.mxu0 0.0
    %302 = vmatmul.mubr.f32.gmra.mxu0 %v95
    %v303 = vpop.f32.mrf.mxu0
    %v304 = vadd.f32 %v80, %v303
    %v305 = vpop.f32.mrf.mxu0
    %306 = vmatprep.mubr.f32.mxu0 0.0
    %307 = vmatmul.mubr.f32.gmra.mxu0 %v98
    %v308 = vpop.f32.mrf.mxu0
    %v309 = vadd.f32 %v80, %v308
    %v310 = vpop.f32.mrf.mxu0
    %311 = vmatprep.mubr.f32.mxu0 0.0
    %312 = vmatmul.mubr.f32.gmra.mxu0 %v101
    %v313 = vpop.f32.mrf.mxu0
    %v314 = vadd.f32 %v80, %v313
    %v315 = vpop.f32.mrf.mxu0
    %316 = vmatprep.mubr.f32.mxu0 0.0
    %317 = vmatmul.mubr.f32.gmra.mxu0 %v104
    %v318 = vpop.f32.mrf.mxu0
    %v319 = vadd.f32 %v80, %v318
    %v320 = vpop.f32.mrf.mxu0
    %321 = vmatprep.mubr.f32.mxu0 0.0
    %322 = vmatmul.mubr.f32.gmra.mxu0 %v107
    %v323 = vpop.f32.mrf.mxu0
    %v324 = vadd.f32 %v80, %v323
    %v325 = vpop.f32.mrf.mxu0
    %326 = vdwg.mxu0
    %327 = vst [vmem:[#allocation2] sm:$0xff] %v176
    %328 = vst [vmem:[#allocation2 + $0x8] sm:$0xff] %v178
    %329 = vst [vmem:[#allocation2 + $0x10] sm:$0xff] %v289
    %330 = vst [vmem:[#allocation2 + $0x18] sm:$0xff] %v182
    %331 = vst [vmem:[#allocation2 + $0x20] sm:$0xff] %v184
    %332 = vst [vmem:[#allocation2 + $0x28] sm:$0xff] %v294
    %333 = vst [vmem:[#allocation2 + $0x30] sm:$0xff] %v188
    %334 = vst [vmem:[#allocation2 + $0x38] sm:$0xff] %v190
    %335 = vst [vmem:[#allocation2 + $0x40] sm:$0xff] %v299
    %336 = vst [vmem:[#allocation2 + $0x48] sm:$0xff] %v194
    %337 = vst [vmem:[#allocation2 + $0x50] sm:$0xff] %v196
    %338 = vst [vmem:[#allocation2 + $0x58] sm:$0xff] %v304
    %339 = vst [vmem:[#allocation2 + $0x60] sm:$0xff] %v200
    %340 = vst [vmem:[#allocation2 + $0x68] sm:$0xff] %v202
    %341 = vst [vmem:[#allocation2 + $0x70] sm:$0xff] %v309
    %342 = vst [vmem:[#allocation2 + $0x78] sm:$0xff] %v206
    %343 = vst [vmem:[#allocation2 + $0x80] sm:$0xff] %v208
    %344 = vst [vmem:[#allocation2 + $0x88] sm:$0xff] %v314
    %345 = vst [vmem:[#allocation2 + $0x90] sm:$0xff] %v212
    %346 = vst [vmem:[#allocation2 + $0x98] sm:$0xff] %v214
    %347 = vst [vmem:[#allocation2 + $0xa0] sm:$0xff] %v319
    %348 = vst [vmem:[#allocation2 + $0xa8] sm:$0xff] %v218
    %349 = vst [vmem:[#allocation2 + $0xb0] sm:$0xff] %v220
    %350 = vst [vmem:[#allocation2 + $0xb8] sm:$0xff] %v324
    %v351 = vld [vmem:[#allocation3] sm:$0xff]
    %v352 = vld [vmem:[#allocation3 + $0x8] sm:$0xf]
    %v353 = vld [vmem:[#allocation3 + $0xc] sm:$0xff]
    %v354 = vld [vmem:[#allocation3 + $0x14] sm:$0xf]
    %v355 = vld [vmem:[#allocation3 + $0x18] sm:$0xff]
    %v356 = vld [vmem:[#allocation3 + $0x20] sm:$0xf]
    %v357 = vld [vmem:[#allocation3 + $0x24] sm:$0xff]
    %v358 = vld [vmem:[#allocation3 + $0x2c] sm:$0xf]
    %v359 = vld [vmem:[#allocation3 + $0x30] sm:$0xff]
    %v360 = vld [vmem:[#allocation3 + $0x38] sm:$0xf]
    %v361 = vld [vmem:[#allocation3 + $0x3c] sm:$0xff]
    %v362 = vld [vmem:[#allocation3 + $0x44] sm:$0xf]
    %v363 = vld [vmem:[#allocation3 + $0x48] sm:$0xff]
    %v364 = vld [vmem:[#allocation3 + $0x50] sm:$0xf]
    %v365 = vld [vmem:[#allocation3 + $0x54] sm:$0xff]
    %v366 = vld [vmem:[#allocation3 + $0x5c] sm:$0xf]
    %v367 = vld [vmem:[#allocation3 + $0x60] sm:$0xff]
    %v368 = vld [vmem:[#allocation3 + $0x68] sm:$0xf]
    %v369 = vld [vmem:[#allocation3 + $0x6c] sm:$0xff]
    %v370 = vld [vmem:[#allocation3 + $0x74] sm:$0xf]
    %v371 = vld [vmem:[#allocation3 + $0x78] sm:$0xff]
    %v372 = vld [vmem:[#allocation3 + $0x80] sm:$0xf]
    %v373 = vld [vmem:[#allocation3 + $0x84] sm:$0xff]
    %v374 = vld [vmem:[#allocation3 + $0x8c] sm:$0xf]
    %v375 = vld [vmem:[#allocation3 + $0x90] sm:$0xff]
    %v376 = vld [vmem:[#allocation3 + $0x98] sm:$0xf]
    %v377 = vld [vmem:[#allocation3 + $0x9c] sm:$0xff]
    %v378 = vld [vmem:[#allocation3 + $0xa4] sm:$0xf]
    %v379 = vld [vmem:[#allocation3 + $0xa8] sm:$0xff]
    %v380 = vld [vmem:[#allocation3 + $0xb0] sm:$0xf]
    %v381 = vld [vmem:[#allocation3 + $0xb4] sm:$0xff]
    %v382 = vld [vmem:[#allocation3 + $0xbc] sm:$0xf]
    %v383 = vld [vmem:[%s4] sm:$0x1]
    %v385 = vlaneseq
    %v386 = vshrl.u32 %v385, 7
    %v387 = vsub.s32 0, %v386
    %v388 = vrot.slane %v383, %v387
    %s390 = smul.u32 0, 3
    %s391 = smul.addr %s390, 8
    %s392 = scalar_lea.vmem [#allocation2], %s391
    %v393 = vld [vmem:[%s392] sm:$0xff]
    %v394 = vld [vmem:[%s392 + $0x8] sm:$0xff]
    %v395 = vld [vmem:[%s392 + $0x10] sm:$0xff]
    %v428 = vunpack.c.l.b16 %v351
    %v429 = vunpack.c.h.b16 %v351
    %v430 = vunpack.c.l.b16 %v352
    %v431 = vunpack.c.l.b16 %v353
    %v432 = vunpack.c.h.b16 %v353
    %v433 = vunpack.c.l.b16 %v354
    %v434 = vunpack.c.l.b16 %v355
    %v435 = vunpack.c.h.b16 %v355
    %v436 = vunpack.c.l.b16 %v356
    %v437 = vunpack.c.l.b16 %v357
    %v438 = vunpack.c.h.b16 %v357
    %v439 = vunpack.c.l.b16 %v358
    %v440 = vunpack.c.l.b16 %v359
    %v441 = vunpack.c.h.b16 %v359
    %v442 = vunpack.c.l.b16 %v360
    %v443 = vunpack.c.l.b16 %v361
    %v444 = vunpack.c.h.b16 %v361
    %v445 = vunpack.c.l.b16 %v362
    %v446 = vunpack.c.l.b16 %v363
    %v447 = vunpack.c.h.b16 %v363
    %v448 = vunpack.c.l.b16 %v364
    %v449 = vunpack.c.l.b16 %v365
    %v450 = vunpack.c.h.b16 %v365
    %v451 = vunpack.c.l.b16 %v366
    %v452 = vunpack.c.l.b16 %v367
    %v453 = vunpack.c.h.b16 %v367
    %v454 = vunpack.c.l.b16 %v368
    %v455 = vunpack.c.l.b16 %v369
    %v456 = vunpack.c.h.b16 %v369
    %v457 = vunpack.c.l.b16 %v370
    %v458 = vunpack.c.l.b16 %v371
    %v459 = vunpack.c.h.b16 %v371
    %v460 = vunpack.c.l.b16 %v372
    %v461 = vunpack.c.l.b16 %v373
    %v462 = vunpack.c.h.b16 %v373
    %v463 = vunpack.c.l.b16 %v374
    %v464 = vunpack.c.l.b16 %v375
    %v465 = vunpack.c.h.b16 %v375
    %v466 = vunpack.c.l.b16 %v376
    %v467 = vunpack.c.l.b16 %v377
    %v468 = vunpack.c.h.b16 %v377
    %v469 = vunpack.c.l.b16 %v378
    %v470 = vunpack.c.l.b16 %v379
    %v471 = vunpack.c.h.b16 %v379
    %v472 = vunpack.c.l.b16 %v380
    %v473 = vunpack.c.l.b16 %v381
    %v474 = vunpack.c.h.b16 %v381
    %v475 = vunpack.c.l.b16 %v382
    %v476 = vpack.c.b16 %v431, %v428
    %v477 = vpack.c.b16 %v432, %v429
    %v478 = vpack.c.b16 %v433, %v430
    %v479 = vpack.c.b16 %v437, %v434
    %v480 = vpack.c.b16 %v438, %v435
    %v481 = vpack.c.b16 %v439, %v436
    %v482 = vpack.c.b16 %v443, %v440
    %v483 = vpack.c.b16 %v444, %v441
    %v484 = vpack.c.b16 %v445, %v442
    %v485 = vpack.c.b16 %v449, %v446
    %v486 = vpack.c.b16 %v450, %v447
    %v487 = vpack.c.b16 %v451, %v448
    %v488 = vpack.c.b16 %v455, %v452
    %v489 = vpack.c.b16 %v456, %v453
    %v490 = vpack.c.b16 %v457, %v454
    %v491 = vpack.c.b16 %v461, %v458
    %v492 = vpack.c.b16 %v462, %v459
    %v493 = vpack.c.b16 %v463, %v460
    %v494 = vpack.c.b16 %v467, %v464
    %v495 = vpack.c.b16 %v468, %v465
    %v496 = vpack.c.b16 %v469, %v466
    %v497 = vpack.c.b16 %v473, %v470
    %v498 = vpack.c.b16 %v474, %v471
    %v499 = vpack.c.b16 %v475, %v472
    %524 = vmatprep.subr.bf16.mxu0 %v498
    %525 = vmatpush1.bf16.msra.mxu0 %v497
    %526 = vmatprep.subr.bf16.mxu0 %v495
    %527 = vmatpush1.bf16.msra.mxu0 %v494
    %528 = vmatprep.subr.bf16.mxu0 %v492
    %529 = vmatpush1.bf16.msra.mxu0 %v491
    %530 = vmatprep.subr.bf16.mxu0 %v489
    %531 = vmatpush1.bf16.msra.mxu0 %v488
    %532 = vmatprep.subr.bf16.mxu0 %v486
    %533 = vmatpush1.bf16.msra.mxu0 %v485
    %534 = vmatprep.subr.bf16.mxu0 %v483
    %535 = vmatpush1.bf16.msra.mxu0 %v482
    %536 = vmatprep.subr.bf16.mxu0 %v480
    %537 = vmatpush1.bf16.msra.mxu0 %v479
    %538 = vmatprep.subr.bf16.mxu0 %v477
    %539 = vmatpush1.bf16.msra.mxu0 %v476
    %540 = vmatprep.subr.bf16.mxu0 0
    %541 = vmatpush2.bf16.msra.mxu0 0
    %542 = vmatprep.subr.bf16.mxu0 0
    %543 = vmatpush2.bf16.msra.mxu0 0
    %544 = vmatprep.subr.bf16.mxu0 0
    %545 = vmatpush2.bf16.msra.mxu0 0
    %546 = vmatprep.subr.bf16.mxu0 0
    %547 = vmatpush2.bf16.msra.mxu0 0
    %548 = vmatprep.subr.bf16.mxu0 0
    %549 = vmatpush2.bf16.msra.mxu0 0
    %550 = vmatprep.subr.bf16.mxu0 0
    %551 = vmatpush2.bf16.msra.mxu0 0
    %552 = vmatprep.subr.bf16.mxu0 0
    %553 = vmatpush2.bf16.msra.mxu0 0
    %554 = vmatprep.subr.bf16.mxu0 0
    %555 = vmatpush2.bf16.msra.mxu0 0
    %556 = vmatprep.mubr.bf16.mxu0 0
    %557 = vmatmul.mubr.bf16.gmra.mxu0 0
    %v558 = vpop.f32.mrf.mxu0
    %v559 = vadd.f32 0.0, %v558
    %v560 = vpop.f32.mrf.mxu0
    %v561 = vadd.f32 0.0, %v560
    %v562 = vpop.f32.mrf.mxu0
    %v563 = vpop.f32.mrf.mxu0
    %564 = vdwg.mxu0
    %565 = vmatprep.subr.bf16.mxu0 0
    %566 = vmatpush1.bf16.msra.mxu0 %v499
    %567 = vmatprep.subr.bf16.mxu0 0
    %568 = vmatpush1.bf16.msra.mxu0 %v496
    %569 = vmatprep.subr.bf16.mxu0 0
    %570 = vmatpush1.bf16.msra.mxu0 %v493
    %571 = vmatprep.subr.bf16.mxu0 0
    %572 = vmatpush1.bf16.msra.mxu0 %v490
    %573 = vmatprep.subr.bf16.mxu0 0
    %574 = vmatpush1.bf16.msra.mxu0 %v487
    %575 = vmatprep.subr.bf16.mxu0 0
    %576 = vmatpush1.bf16.msra.mxu0 %v484
    %577 = vmatprep.subr.bf16.mxu0 0
    %578 = vmatpush1.bf16.msra.mxu0 %v481
    %579 = vmatprep.subr.bf16.mxu0 0
    %580 = vmatpush1.bf16.msra.mxu0 %v478
    %581 = vmatprep.subr.bf16.mxu0 0
    %582 = vmatpush2.bf16.msra.mxu0 0
    %583 = vmatprep.subr.bf16.mxu0 0
    %584 = vmatpush2.bf16.msra.mxu0 0
    %585 = vmatprep.subr.bf16.mxu0 0
    %586 = vmatpush2.bf16.msra.mxu0 0
    %587 = vmatprep.subr.bf16.mxu0 0
    %588 = vmatpush2.bf16.msra.mxu0 0
    %589 = vmatprep.subr.bf16.mxu0 0
    %590 = vmatpush2.bf16.msra.mxu0 0
    %591 = vmatprep.subr.bf16.mxu0 0
    %592 = vmatpush2.bf16.msra.mxu0 0
    %593 = vmatprep.subr.bf16.mxu0 0
    %594 = vmatpush2.bf16.msra.mxu0 0
    %595 = vmatprep.subr.bf16.mxu0 0
    %596 = vmatpush2.bf16.msra.mxu0 0
    %597 = vmatprep.mubr.bf16.mxu0 0
    %598 = vmatmul.mubr.bf16.gmra.mxu0 0
    %v599 = vpop.f32.mrf.mxu0
    %v600 = vadd.f32 0.0, %v599
    %v601 = vpop.f32.mrf.mxu0
    %v602 = vpop.f32.mrf.mxu0
    %v603 = vpop.f32.mrf.mxu0
    %604 = vdwg.mxu0
    %v605 = vadd.f32 %v393, %v559
    %v606 = vxor.u32 %v605, 2147483648
    %v607 = vmul.f32 %v606, 1.442695
    %v608 = vpow.pop %v607
    %v609 = vadd.f32 %v608, 1.0
    %v610 = vrcp.pop %v609
    %v611 = vmul.f32 1.0, %v610
    %v612 = vadd.f32 %v394, %v561
    %v613 = vxor.u32 %v612, 2147483648
    %v614 = vmul.f32 %v613, 1.442695
    %v615 = vpow.pop %v614
    %v616 = vadd.f32 %v615, 1.0
    %v617 = vrcp.pop %v616
    %v618 = vmul.f32 1.0, %v617
    %v619 = vadd.f32 %v600, %v388
    %v620 = vmul.f32 %v611, %v619
    %v621 = vadd.f32 %v395, %v620
    %v622 = vtanh.pop %v621
    %v623 = vsub.f32 1.0, %v618
    %v624 = vmul.f32 %v623, %v622
    %v625 = vmul.f32 %v618, 0.0
    %v626 = vadd.f32 %v624, %v625
    %s627 = smul.u32 1, 3
    %s628 = smul.addr %s627, 8
    %s629 = scalar_lea.vmem [#allocation2], %s628
    %v630 = vld [vmem:[%s629] sm:$0xff]
    %v631 = vld [vmem:[%s629 + $0x8] sm:$0xff]
    %v632 = vld [vmem:[%s629 + $0x10] sm:$0xff]
    %v633 = vpack.c.bf16 %v626, %v626
    %634 = vmatprep.subr.bf16.mxu0 %v498
    %635 = vmatpush1.bf16.msra.mxu0 %v497
    %636 = vmatprep.subr.bf16.mxu0 %v495
    %637 = vmatpush1.bf16.msra.mxu0 %v494
    %638 = vmatprep.subr.bf16.mxu0 %v492
    %639 = vmatpush1.bf16.msra.mxu0 %v491
    %640 = vmatprep.subr.bf16.mxu0 %v489
    %641 = vmatpush1.bf16.msra.mxu0 %v488
    %642 = vmatprep.subr.bf16.mxu0 %v486
    %643 = vmatpush1.bf16.msra.mxu0 %v485
    %644 = vmatprep.subr.bf16.mxu0 %v483
    %645 = vmatpush1.bf16.msra.mxu0 %v482
    %646 = vmatprep.subr.bf16.mxu0 %v480
    %647 = vmatpush1.bf16.msra.mxu0 %v479
    %648 = vmatprep.subr.bf16.mxu0 %v477
    %649 = vmatpush1.bf16.msra.mxu0 %v476
    %650 = vmatprep.subr.bf16.mxu0 0
    %651 = vmatpush2.bf16.msra.mxu0 0
    %652 = vmatprep.subr.bf16.mxu0 0
    %653 = vmatpush2.bf16.msra.mxu0 0
    %654 = vmatprep.subr.bf16.mxu0 0
    %655 = vmatpush2.bf16.msra.mxu0 0
    %656 = vmatprep.subr.bf16.mxu0 0
    %657 = vmatpush2.bf16.msra.mxu0 0
    %658 = vmatprep.subr.bf16.mxu0 0
    %659 = vmatpush2.bf16.msra.mxu0 0
    %660 = vmatprep.subr.bf16.mxu0 0
    %661 = vmatpush2.bf16.msra.mxu0 0
    %662 = vmatprep.subr.bf16.mxu0 0
    %663 = vmatpush2.bf16.msra.mxu0 0
    %664 = vmatprep.subr.bf16.mxu0 0
    %665 = vmatpush2.bf16.msra.mxu0 0
    %666 = vmatprep.mubr.bf16.mxu0 0
    %667 = vmatmul.mubr.bf16.gmra.mxu0 %v633
    %v668 = vpop.f32.mrf.mxu0
    %v669 = vadd.f32 0.0, %v668
    %v670 = vpop.f32.mrf.mxu0
    %v671 = vadd.f32 0.0, %v670
    %v672 = vpop.f32.mrf.mxu0
    %v673 = vpop.f32.mrf.mxu0
    %674 = vdwg.mxu0
    %675 = vmatprep.subr.bf16.mxu0 0
    %676 = vmatpush1.bf16.msra.mxu0 %v499
    %677 = vmatprep.subr.bf16.mxu0 0
    %678 = vmatpush1.bf16.msra.mxu0 %v496
    %679 = vmatprep.subr.bf16.mxu0 0
    %680 = vmatpush1.bf16.msra.mxu0 %v493
    %681 = vmatprep.subr.bf16.mxu0 0
    %682 = vmatpush1.bf16.msra.mxu0 %v490
    %683 = vmatprep.subr.bf16.mxu0 0
    %684 = vmatpush1.bf16.msra.mxu0 %v487
    %685 = vmatprep.subr.bf16.mxu0 0
    %686 = vmatpush1.bf16.msra.mxu0 %v484
    %687 = vmatprep.subr.bf16.mxu0 0
    %688 = vmatpush1.bf16.msra.mxu0 %v481
    %689 = vmatprep.subr.bf16.mxu0 0
    %690 = vmatpush1.bf16.msra.mxu0 %v478
    %691 = vmatprep.subr.bf16.mxu0 0
    %692 = vmatpush2.bf16.msra.mxu0 0
    %693 = vmatprep.subr.bf16.mxu0 0
    %694 = vmatpush2.bf16.msra.mxu0 0
    %695 = vmatprep.subr.bf16.mxu0 0
    %696 = vmatpush2.bf16.msra.mxu0 0
    %697 = vmatprep.subr.bf16.mxu0 0
    %698 = vmatpush2.bf16.msra.mxu0 0
    %699 = vmatprep.subr.bf16.mxu0 0
    %700 = vmatpush2.bf16.msra.mxu0 0
    %701 = vmatprep.subr.bf16.mxu0 0
    %702 = vmatpush2.bf16.msra.mxu0 0
    %703 = vmatprep.subr.bf16.mxu0 0
    %704 = vmatpush2.bf16.msra.mxu0 0
    %705 = vmatprep.subr.bf16.mxu0 0
    %706 = vmatpush2.bf16.msra.mxu0 0
    %707 = vmatprep.mubr.bf16.mxu0 0
    %708 = vmatmul.mubr.bf16.gmra.mxu0 %v633
    %v709 = vpop.f32.mrf.mxu0
    %v710 = vadd.f32 0.0, %v709
    %v711 = vpop.f32.mrf.mxu0
    %v712 = vpop.f32.mrf.mxu0
    %v713 = vpop.f32.mrf.mxu0
    %714 = vdwg.mxu0
    %v715 = vadd.f32 %v630, %v669
    %v716 = vxor.u32 %v715, 2147483648
    %v717 = vmul.f32 %v716, 1.442695
    %v718 = vpow.pop %v717
    %v719 = vadd.f32 %v718, 1.0
    %v720 = vrcp.pop %v719
    %v721 = vmul.f32 1.0, %v720
    %v722 = vadd.f32 %v631, %v671
    %v723 = vxor.u32 %v722, 2147483648
    %v724 = vmul.f32 %v723, 1.442695
    %v725 = vpow.pop %v724
    %v726 = vadd.f32 %v725, 1.0
    %v727 = vrcp.pop %v726
    %v728 = vmul.f32 1.0, %v727
    %v729 = vadd.f32 %v710, %v388
    %v730 = vmul.f32 %v721, %v729
    %v731 = vadd.f32 %v632, %v730
    %v732 = vtanh.pop %v731
    %v733 = vsub.f32 1.0, %v728
    %v734 = vmul.f32 %v733, %v732
    %v735 = vmul.f32 %v728, %v626
    %v736 = vadd.f32 %v734, %v735
    %s737 = smul.u32 2, 3
    %s738 = smul.addr %s737, 8
    %s739 = scalar_lea.vmem [#allocation2], %s738
    %v740 = vld [vmem:[%s739] sm:$0xff]
    %v741 = vld [vmem:[%s739 + $0x8] sm:$0xff]
    %v742 = vld [vmem:[%s739 + $0x10] sm:$0xff]
    %v743 = vpack.c.bf16 %v736, %v736
    %744 = vmatprep.subr.bf16.mxu0 %v498
    %745 = vmatpush1.bf16.msra.mxu0 %v497
    %746 = vmatprep.subr.bf16.mxu0 %v495
    %747 = vmatpush1.bf16.msra.mxu0 %v494
    %748 = vmatprep.subr.bf16.mxu0 %v492
    %749 = vmatpush1.bf16.msra.mxu0 %v491
    %750 = vmatprep.subr.bf16.mxu0 %v489
    %751 = vmatpush1.bf16.msra.mxu0 %v488
    %752 = vmatprep.subr.bf16.mxu0 %v486
    %753 = vmatpush1.bf16.msra.mxu0 %v485
    %754 = vmatprep.subr.bf16.mxu0 %v483
    %755 = vmatpush1.bf16.msra.mxu0 %v482
    %756 = vmatprep.subr.bf16.mxu0 %v480
    %757 = vmatpush1.bf16.msra.mxu0 %v479
    %758 = vmatprep.subr.bf16.mxu0 %v477
    %759 = vmatpush1.bf16.msra.mxu0 %v476
    %760 = vmatprep.subr.bf16.mxu0 0
    %761 = vmatpush2.bf16.msra.mxu0 0
    %762 = vmatprep.subr.bf16.mxu0 0
    %763 = vmatpush2.bf16.msra.mxu0 0
    %764 = vmatprep.subr.bf16.mxu0 0
    %765 = vmatpush2.bf16.msra.mxu0 0
    %766 = vmatprep.subr.bf16.mxu0 0
    %767 = vmatpush2.bf16.msra.mxu0 0
    %768 = vmatprep.subr.bf16.mxu0 0
    %769 = vmatpush2.bf16.msra.mxu0 0
    %770 = vmatprep.subr.bf16.mxu0 0
    %771 = vmatpush2.bf16.msra.mxu0 0
    %772 = vmatprep.subr.bf16.mxu0 0
    %773 = vmatpush2.bf16.msra.mxu0 0
    %774 = vmatprep.subr.bf16.mxu0 0
    %775 = vmatpush2.bf16.msra.mxu0 0
    %776 = vmatprep.mubr.bf16.mxu0 0
    %777 = vmatmul.mubr.bf16.gmra.mxu0 %v743
    %v778 = vpop.f32.mrf.mxu0
    %v779 = vadd.f32 0.0, %v778
    %v780 = vpop.f32.mrf.mxu0
    %v781 = vadd.f32 0.0, %v780
    %v782 = vpop.f32.mrf.mxu0
    %v783 = vpop.f32.mrf.mxu0
    %784 = vdwg.mxu0
    %785 = vmatprep.subr.bf16.mxu0 0
    %786 = vmatpush1.bf16.msra.mxu0 %v499
    %787 = vmatprep.subr.bf16.mxu0 0
    %788 = vmatpush1.bf16.msra.mxu0 %v496
    %789 = vmatprep.subr.bf16.mxu0 0
    %790 = vmatpush1.bf16.msra.mxu0 %v493
    %791 = vmatprep.subr.bf16.mxu0 0
    %792 = vmatpush1.bf16.msra.mxu0 %v490
    %793 = vmatprep.subr.bf16.mxu0 0
    %794 = vmatpush1.bf16.msra.mxu0 %v487
    %795 = vmatprep.subr.bf16.mxu0 0
    %796 = vmatpush1.bf16.msra.mxu0 %v484
    %797 = vmatprep.subr.bf16.mxu0 0
    %798 = vmatpush1.bf16.msra.mxu0 %v481
    %799 = vmatprep.subr.bf16.mxu0 0
    %800 = vmatpush1.bf16.msra.mxu0 %v478
    %801 = vmatprep.subr.bf16.mxu0 0
    %802 = vmatpush2.bf16.msra.mxu0 0
    %803 = vmatprep.subr.bf16.mxu0 0
    %804 = vmatpush2.bf16.msra.mxu0 0
    %805 = vmatprep.subr.bf16.mxu0 0
    %806 = vmatpush2.bf16.msra.mxu0 0
    %807 = vmatprep.subr.bf16.mxu0 0
    %808 = vmatpush2.bf16.msra.mxu0 0
    %809 = vmatprep.subr.bf16.mxu0 0
    %810 = vmatpush2.bf16.msra.mxu0 0
    %811 = vmatprep.subr.bf16.mxu0 0
    %812 = vmatpush2.bf16.msra.mxu0 0
    %813 = vmatprep.subr.bf16.mxu0 0
    %814 = vmatpush2.bf16.msra.mxu0 0
    %815 = vmatprep.subr.bf16.mxu0 0
    %816 = vmatpush2.bf16.msra.mxu0 0
    %817 = vmatprep.mubr.bf16.mxu0 0
    %818 = vmatmul.mubr.bf16.gmra.mxu0 %v743
    %v819 = vpop.f32.mrf.mxu0
    %v820 = vadd.f32 0.0, %v819
    %v821 = vpop.f32.mrf.mxu0
    %v822 = vpop.f32.mrf.mxu0
    %v823 = vpop.f32.mrf.mxu0
    %824 = vdwg.mxu0
    %v825 = vadd.f32 %v740, %v779
    %v826 = vxor.u32 %v825, 2147483648
    %v827 = vmul.f32 %v826, 1.442695
    %v828 = vpow.pop %v827
    %v829 = vadd.f32 %v828, 1.0
    %v830 = vrcp.pop %v829
    %v831 = vmul.f32 1.0, %v830
    %v832 = vadd.f32 %v741, %v781
    %v833 = vxor.u32 %v832, 2147483648
    %v834 = vmul.f32 %v833, 1.442695
    %v835 = vpow.pop %v834
    %v836 = vadd.f32 %v835, 1.0
    %v837 = vrcp.pop %v836
    %v838 = vmul.f32 1.0, %v837
    %v839 = vadd.f32 %v820, %v388
    %v840 = vmul.f32 %v831, %v839
    %v841 = vadd.f32 %v742, %v840
    %v842 = vtanh.pop %v841
    %v843 = vsub.f32 1.0, %v838
    %v844 = vmul.f32 %v843, %v842
    %v845 = vmul.f32 %v838, %v736
    %v846 = vadd.f32 %v844, %v845
    %s847 = smul.u32 3, 3
    %s848 = smul.addr %s847, 8
    %s849 = scalar_lea.vmem [#allocation2], %s848
    %v850 = vld [vmem:[%s849] sm:$0xff]
    %v851 = vld [vmem:[%s849 + $0x8] sm:$0xff]
    %v852 = vld [vmem:[%s849 + $0x10] sm:$0xff]
    %v853 = vpack.c.bf16 %v846, %v846
    %854 = vmatprep.subr.bf16.mxu0 %v498
    %855 = vmatpush1.bf16.msra.mxu0 %v497
    %856 = vmatprep.subr.bf16.mxu0 %v495
    %857 = vmatpush1.bf16.msra.mxu0 %v494
    %858 = vmatprep.subr.bf16.mxu0 %v492
    %859 = vmatpush1.bf16.msra.mxu0 %v491
    %860 = vmatprep.subr.bf16.mxu0 %v489
    %861 = vmatpush1.bf16.msra.mxu0 %v488
    %862 = vmatprep.subr.bf16.mxu0 %v486
    %863 = vmatpush1.bf16.msra.mxu0 %v485
    %864 = vmatprep.subr.bf16.mxu0 %v483
    %865 = vmatpush1.bf16.msra.mxu0 %v482
    %866 = vmatprep.subr.bf16.mxu0 %v480
    %867 = vmatpush1.bf16.msra.mxu0 %v479
    %868 = vmatprep.subr.bf16.mxu0 %v477
    %869 = vmatpush1.bf16.msra.mxu0 %v476
    %870 = vmatprep.subr.bf16.mxu0 0
    %871 = vmatpush2.bf16.msra.mxu0 0
    %872 = vmatprep.subr.bf16.mxu0 0
    %873 = vmatpush2.bf16.msra.mxu0 0
    %874 = vmatprep.subr.bf16.mxu0 0
    %875 = vmatpush2.bf16.msra.mxu0 0
    %876 = vmatprep.subr.bf16.mxu0 0
    %877 = vmatpush2.bf16.msra.mxu0 0
    %878 = vmatprep.subr.bf16.mxu0 0
    %879 = vmatpush2.bf16.msra.mxu0 0
    %880 = vmatprep.subr.bf16.mxu0 0
    %881 = vmatpush2.bf16.msra.mxu0 0
    %882 = vmatprep.subr.bf16.mxu0 0
    %883 = vmatpush2.bf16.msra.mxu0 0
    %884 = vmatprep.subr.bf16.mxu0 0
    %885 = vmatpush2.bf16.msra.mxu0 0
    %886 = vmatprep.mubr.bf16.mxu0 0
    %887 = vmatmul.mubr.bf16.gmra.mxu0 %v853
    %v888 = vpop.f32.mrf.mxu0
    %v889 = vadd.f32 0.0, %v888
    %v890 = vpop.f32.mrf.mxu0
    %v891 = vadd.f32 0.0, %v890
    %v892 = vpop.f32.mrf.mxu0
    %v893 = vpop.f32.mrf.mxu0
    %894 = vdwg.mxu0
    %895 = vmatprep.subr.bf16.mxu0 0
    %896 = vmatpush1.bf16.msra.mxu0 %v499
    %897 = vmatprep.subr.bf16.mxu0 0
    %898 = vmatpush1.bf16.msra.mxu0 %v496
    %899 = vmatprep.subr.bf16.mxu0 0
    %900 = vmatpush1.bf16.msra.mxu0 %v493
    %901 = vmatprep.subr.bf16.mxu0 0
    %902 = vmatpush1.bf16.msra.mxu0 %v490
    %903 = vmatprep.subr.bf16.mxu0 0
    %904 = vmatpush1.bf16.msra.mxu0 %v487
    %905 = vmatprep.subr.bf16.mxu0 0
    %906 = vmatpush1.bf16.msra.mxu0 %v484
    %907 = vmatprep.subr.bf16.mxu0 0
    %908 = vmatpush1.bf16.msra.mxu0 %v481
    %909 = vmatprep.subr.bf16.mxu0 0
    %910 = vmatpush1.bf16.msra.mxu0 %v478
    %911 = vmatprep.subr.bf16.mxu0 0
    %912 = vmatpush2.bf16.msra.mxu0 0
    %913 = vmatprep.subr.bf16.mxu0 0
    %914 = vmatpush2.bf16.msra.mxu0 0
    %915 = vmatprep.subr.bf16.mxu0 0
    %916 = vmatpush2.bf16.msra.mxu0 0
    %917 = vmatprep.subr.bf16.mxu0 0
    %918 = vmatpush2.bf16.msra.mxu0 0
    %919 = vmatprep.subr.bf16.mxu0 0
    %920 = vmatpush2.bf16.msra.mxu0 0
    %921 = vmatprep.subr.bf16.mxu0 0
    %922 = vmatpush2.bf16.msra.mxu0 0
    %923 = vmatprep.subr.bf16.mxu0 0
    %924 = vmatpush2.bf16.msra.mxu0 0
    %925 = vmatprep.subr.bf16.mxu0 0
    %926 = vmatpush2.bf16.msra.mxu0 0
    %927 = vmatprep.mubr.bf16.mxu0 0
    %928 = vmatmul.mubr.bf16.gmra.mxu0 %v853
    %v929 = vpop.f32.mrf.mxu0
    %v930 = vadd.f32 0.0, %v929
    %v931 = vpop.f32.mrf.mxu0
    %v932 = vpop.f32.mrf.mxu0
    %v933 = vpop.f32.mrf.mxu0
    %934 = vdwg.mxu0
    %v935 = vadd.f32 %v850, %v889
    %v936 = vxor.u32 %v935, 2147483648
    %v937 = vmul.f32 %v936, 1.442695
    %v938 = vpow.pop %v937
    %v939 = vadd.f32 %v938, 1.0
    %v940 = vrcp.pop %v939
    %v941 = vmul.f32 1.0, %v940
    %v942 = vadd.f32 %v851, %v891
    %v943 = vxor.u32 %v942, 2147483648
    %v944 = vmul.f32 %v943, 1.442695
    %v945 = vpow.pop %v944
    %v946 = vadd.f32 %v945, 1.0
    %v947 = vrcp.pop %v946
    %v948 = vmul.f32 1.0, %v947
    %v949 = vadd.f32 %v930, %v388
    %v950 = vmul.f32 %v941, %v949
    %v951 = vadd.f32 %v852, %v950
    %v952 = vtanh.pop %v951
    %v953 = vsub.f32 1.0, %v948
    %v954 = vmul.f32 %v953, %v952
    %v955 = vmul.f32 %v948, %v846
    %v956 = vadd.f32 %v954, %v955
    %s957 = smul.u32 4, 3
    %s958 = smul.addr %s957, 8
    %s959 = scalar_lea.vmem [#allocation2], %s958
    %v960 = vld [vmem:[%s959] sm:$0xff]
    %v961 = vld [vmem:[%s959 + $0x8] sm:$0xff]
    %v962 = vld [vmem:[%s959 + $0x10] sm:$0xff]
    %v963 = vpack.c.bf16 %v956, %v956
    %964 = vmatprep.subr.bf16.mxu0 %v498
    %965 = vmatpush1.bf16.msra.mxu0 %v497
    %966 = vmatprep.subr.bf16.mxu0 %v495
    %967 = vmatpush1.bf16.msra.mxu0 %v494
    %968 = vmatprep.subr.bf16.mxu0 %v492
    %969 = vmatpush1.bf16.msra.mxu0 %v491
    %970 = vmatprep.subr.bf16.mxu0 %v489
    %971 = vmatpush1.bf16.msra.mxu0 %v488
    %972 = vmatprep.subr.bf16.mxu0 %v486
    %973 = vmatpush1.bf16.msra.mxu0 %v485
    %974 = vmatprep.subr.bf16.mxu0 %v483
    %975 = vmatpush1.bf16.msra.mxu0 %v482
    %976 = vmatprep.subr.bf16.mxu0 %v480
    %977 = vmatpush1.bf16.msra.mxu0 %v479
    %978 = vmatprep.subr.bf16.mxu0 %v477
    %979 = vmatpush1.bf16.msra.mxu0 %v476
    %980 = vmatprep.subr.bf16.mxu0 0
    %981 = vmatpush2.bf16.msra.mxu0 0
    %982 = vmatprep.subr.bf16.mxu0 0
    %983 = vmatpush2.bf16.msra.mxu0 0
    %984 = vmatprep.subr.bf16.mxu0 0
    %985 = vmatpush2.bf16.msra.mxu0 0
    %986 = vmatprep.subr.bf16.mxu0 0
    %987 = vmatpush2.bf16.msra.mxu0 0
    %988 = vmatprep.subr.bf16.mxu0 0
    %989 = vmatpush2.bf16.msra.mxu0 0
    %990 = vmatprep.subr.bf16.mxu0 0
    %991 = vmatpush2.bf16.msra.mxu0 0
    %992 = vmatprep.subr.bf16.mxu0 0
    %993 = vmatpush2.bf16.msra.mxu0 0
    %994 = vmatprep.subr.bf16.mxu0 0
    %995 = vmatpush2.bf16.msra.mxu0 0
    %996 = vmatprep.mubr.bf16.mxu0 0
    %997 = vmatmul.mubr.bf16.gmra.mxu0 %v963
    %v998 = vpop.f32.mrf.mxu0
    %v999 = vadd.f32 0.0, %v998
    %v1000 = vpop.f32.mrf.mxu0
    %v1001 = vadd.f32 0.0, %v1000
    %v1002 = vpop.f32.mrf.mxu0
    %v1003 = vpop.f32.mrf.mxu0
    %1004 = vdwg.mxu0
    %1005 = vmatprep.subr.bf16.mxu0 0
    %1006 = vmatpush1.bf16.msra.mxu0 %v499
    %1007 = vmatprep.subr.bf16.mxu0 0
    %1008 = vmatpush1.bf16.msra.mxu0 %v496
    %1009 = vmatprep.subr.bf16.mxu0 0
    %1010 = vmatpush1.bf16.msra.mxu0 %v493
    %1011 = vmatprep.subr.bf16.mxu0 0
    %1012 = vmatpush1.bf16.msra.mxu0 %v490
    %1013 = vmatprep.subr.bf16.mxu0 0
    %1014 = vmatpush1.bf16.msra.mxu0 %v487
    %1015 = vmatprep.subr.bf16.mxu0 0
    %1016 = vmatpush1.bf16.msra.mxu0 %v484
    %1017 = vmatprep.subr.bf16.mxu0 0
    %1018 = vmatpush1.bf16.msra.mxu0 %v481
    %1019 = vmatprep.subr.bf16.mxu0 0
    %1020 = vmatpush1.bf16.msra.mxu0 %v478
    %1021 = vmatprep.subr.bf16.mxu0 0
    %1022 = vmatpush2.bf16.msra.mxu0 0
    %1023 = vmatprep.subr.bf16.mxu0 0
    %1024 = vmatpush2.bf16.msra.mxu0 0
    %1025 = vmatprep.subr.bf16.mxu0 0
    %1026 = vmatpush2.bf16.msra.mxu0 0
    %1027 = vmatprep.subr.bf16.mxu0 0
    %1028 = vmatpush2.bf16.msra.mxu0 0
    %1029 = vmatprep.subr.bf16.mxu0 0
    %1030 = vmatpush2.bf16.msra.mxu0 0
    %1031 = vmatprep.subr.bf16.mxu0 0
    %1032 = vmatpush2.bf16.msra.mxu0 0
    %1033 = vmatprep.subr.bf16.mxu0 0
    %1034 = vmatpush2.bf16.msra.mxu0 0
    %1035 = vmatprep.subr.bf16.mxu0 0
    %1036 = vmatpush2.bf16.msra.mxu0 0
    %1037 = vmatprep.mubr.bf16.mxu0 0
    %1038 = vmatmul.mubr.bf16.gmra.mxu0 %v963
    %v1039 = vpop.f32.mrf.mxu0
    %v1040 = vadd.f32 0.0, %v1039
    %v1041 = vpop.f32.mrf.mxu0
    %v1042 = vpop.f32.mrf.mxu0
    %v1043 = vpop.f32.mrf.mxu0
    %1044 = vdwg.mxu0
    %v1045 = vadd.f32 %v960, %v999
    %v1046 = vxor.u32 %v1045, 2147483648
    %v1047 = vmul.f32 %v1046, 1.442695
    %v1048 = vpow.pop %v1047
    %v1049 = vadd.f32 %v1048, 1.0
    %v1050 = vrcp.pop %v1049
    %v1051 = vmul.f32 1.0, %v1050
    %v1052 = vadd.f32 %v961, %v1001
    %v1053 = vxor.u32 %v1052, 2147483648
    %v1054 = vmul.f32 %v1053, 1.442695
    %v1055 = vpow.pop %v1054
    %v1056 = vadd.f32 %v1055, 1.0
    %v1057 = vrcp.pop %v1056
    %v1058 = vmul.f32 1.0, %v1057
    %v1059 = vadd.f32 %v1040, %v388
    %v1060 = vmul.f32 %v1051, %v1059
    %v1061 = vadd.f32 %v962, %v1060
    %v1062 = vtanh.pop %v1061
    %v1063 = vsub.f32 1.0, %v1058
    %v1064 = vmul.f32 %v1063, %v1062
    %v1065 = vmul.f32 %v1058, %v956
    %v1066 = vadd.f32 %v1064, %v1065
    %s1067 = smul.u32 5, 3
    %s1068 = smul.addr %s1067, 8
    %s1069 = scalar_lea.vmem [#allocation2], %s1068
    %v1070 = vld [vmem:[%s1069] sm:$0xff]
    %v1071 = vld [vmem:[%s1069 + $0x8] sm:$0xff]
    %v1072 = vld [vmem:[%s1069 + $0x10] sm:$0xff]
    %v1073 = vpack.c.bf16 %v1066, %v1066
    %1074 = vmatprep.subr.bf16.mxu0 %v498
    %1075 = vmatpush1.bf16.msra.mxu0 %v497
    %1076 = vmatprep.subr.bf16.mxu0 %v495
    %1077 = vmatpush1.bf16.msra.mxu0 %v494
    %1078 = vmatprep.subr.bf16.mxu0 %v492
    %1079 = vmatpush1.bf16.msra.mxu0 %v491
    %1080 = vmatprep.subr.bf16.mxu0 %v489
    %1081 = vmatpush1.bf16.msra.mxu0 %v488
    %1082 = vmatprep.subr.bf16.mxu0 %v486
    %1083 = vmatpush1.bf16.msra.mxu0 %v485
    %1084 = vmatprep.subr.bf16.mxu0 %v483
    %1085 = vmatpush1.bf16.msra.mxu0 %v482
    %1086 = vmatprep.subr.bf16.mxu0 %v480
    %1087 = vmatpush1.bf16.msra.mxu0 %v479
    %1088 = vmatprep.subr.bf16.mxu0 %v477
    %1089 = vmatpush1.bf16.msra.mxu0 %v476
    %1090 = vmatprep.subr.bf16.mxu0 0
    %1091 = vmatpush2.bf16.msra.mxu0 0
    %1092 = vmatprep.subr.bf16.mxu0 0
    %1093 = vmatpush2.bf16.msra.mxu0 0
    %1094 = vmatprep.subr.bf16.mxu0 0
    %1095 = vmatpush2.bf16.msra.mxu0 0
    %1096 = vmatprep.subr.bf16.mxu0 0
    %1097 = vmatpush2.bf16.msra.mxu0 0
    %1098 = vmatprep.subr.bf16.mxu0 0
    %1099 = vmatpush2.bf16.msra.mxu0 0
    %1100 = vmatprep.subr.bf16.mxu0 0
    %1101 = vmatpush2.bf16.msra.mxu0 0
    %1102 = vmatprep.subr.bf16.mxu0 0
    %1103 = vmatpush2.bf16.msra.mxu0 0
    %1104 = vmatprep.subr.bf16.mxu0 0
    %1105 = vmatpush2.bf16.msra.mxu0 0
    %1106 = vmatprep.mubr.bf16.mxu0 0
    %1107 = vmatmul.mubr.bf16.gmra.mxu0 %v1073
    %v1108 = vpop.f32.mrf.mxu0
    %v1109 = vadd.f32 0.0, %v1108
    %v1110 = vpop.f32.mrf.mxu0
    %v1111 = vadd.f32 0.0, %v1110
    %v1112 = vpop.f32.mrf.mxu0
    %v1113 = vpop.f32.mrf.mxu0
    %1114 = vdwg.mxu0
    %1115 = vmatprep.subr.bf16.mxu0 0
    %1116 = vmatpush1.bf16.msra.mxu0 %v499
    %1117 = vmatprep.subr.bf16.mxu0 0
    %1118 = vmatpush1.bf16.msra.mxu0 %v496
    %1119 = vmatprep.subr.bf16.mxu0 0
    %1120 = vmatpush1.bf16.msra.mxu0 %v493
    %1121 = vmatprep.subr.bf16.mxu0 0
    %1122 = vmatpush1.bf16.msra.mxu0 %v490
    %1123 = vmatprep.subr.bf16.mxu0 0
    %1124 = vmatpush1.bf16.msra.mxu0 %v487
    %1125 = vmatprep.subr.bf16.mxu0 0
    %1126 = vmatpush1.bf16.msra.mxu0 %v484
    %1127 = vmatprep.subr.bf16.mxu0 0
    %1128 = vmatpush1.bf16.msra.mxu0 %v481
    %1129 = vmatprep.subr.bf16.mxu0 0
    %1130 = vmatpush1.bf16.msra.mxu0 %v478
    %1131 = vmatprep.subr.bf16.mxu0 0
    %1132 = vmatpush2.bf16.msra.mxu0 0
    %1133 = vmatprep.subr.bf16.mxu0 0
    %1134 = vmatpush2.bf16.msra.mxu0 0
    %1135 = vmatprep.subr.bf16.mxu0 0
    %1136 = vmatpush2.bf16.msra.mxu0 0
    %1137 = vmatprep.subr.bf16.mxu0 0
    %1138 = vmatpush2.bf16.msra.mxu0 0
    %1139 = vmatprep.subr.bf16.mxu0 0
    %1140 = vmatpush2.bf16.msra.mxu0 0
    %1141 = vmatprep.subr.bf16.mxu0 0
    %1142 = vmatpush2.bf16.msra.mxu0 0
    %1143 = vmatprep.subr.bf16.mxu0 0
    %1144 = vmatpush2.bf16.msra.mxu0 0
    %1145 = vmatprep.subr.bf16.mxu0 0
    %1146 = vmatpush2.bf16.msra.mxu0 0
    %1147 = vmatprep.mubr.bf16.mxu0 0
    %1148 = vmatmul.mubr.bf16.gmra.mxu0 %v1073
    %v1149 = vpop.f32.mrf.mxu0
    %v1150 = vadd.f32 0.0, %v1149
    %v1151 = vpop.f32.mrf.mxu0
    %v1152 = vpop.f32.mrf.mxu0
    %v1153 = vpop.f32.mrf.mxu0
    %1154 = vdwg.mxu0
    %v1155 = vadd.f32 %v1070, %v1109
    %v1156 = vxor.u32 %v1155, 2147483648
    %v1157 = vmul.f32 %v1156, 1.442695
    %v1158 = vpow.pop %v1157
    %v1159 = vadd.f32 %v1158, 1.0
    %v1160 = vrcp.pop %v1159
    %v1161 = vmul.f32 1.0, %v1160
    %v1162 = vadd.f32 %v1071, %v1111
    %v1163 = vxor.u32 %v1162, 2147483648
    %v1164 = vmul.f32 %v1163, 1.442695
    %v1165 = vpow.pop %v1164
    %v1166 = vadd.f32 %v1165, 1.0
    %v1167 = vrcp.pop %v1166
    %v1168 = vmul.f32 1.0, %v1167
    %v1169 = vadd.f32 %v1150, %v388
    %v1170 = vmul.f32 %v1161, %v1169
    %v1171 = vadd.f32 %v1072, %v1170
    %v1172 = vtanh.pop %v1171
    %v1173 = vsub.f32 1.0, %v1168
    %v1174 = vmul.f32 %v1173, %v1172
    %v1175 = vmul.f32 %v1168, %v1066
    %v1176 = vadd.f32 %v1174, %v1175
    %s1177 = smul.u32 6, 3
    %s1178 = smul.addr %s1177, 8
    %s1179 = scalar_lea.vmem [#allocation2], %s1178
    %v1180 = vld [vmem:[%s1179] sm:$0xff]
    %v1181 = vld [vmem:[%s1179 + $0x8] sm:$0xff]
    %v1182 = vld [vmem:[%s1179 + $0x10] sm:$0xff]
    %v1183 = vpack.c.bf16 %v1176, %v1176
    %1184 = vmatprep.subr.bf16.mxu0 %v498
    %1185 = vmatpush1.bf16.msra.mxu0 %v497
    %1186 = vmatprep.subr.bf16.mxu0 %v495
    %1187 = vmatpush1.bf16.msra.mxu0 %v494
    %1188 = vmatprep.subr.bf16.mxu0 %v492
    %1189 = vmatpush1.bf16.msra.mxu0 %v491
    %1190 = vmatprep.subr.bf16.mxu0 %v489
    %1191 = vmatpush1.bf16.msra.mxu0 %v488
    %1192 = vmatprep.subr.bf16.mxu0 %v486
    %1193 = vmatpush1.bf16.msra.mxu0 %v485
    %1194 = vmatprep.subr.bf16.mxu0 %v483
    %1195 = vmatpush1.bf16.msra.mxu0 %v482
    %1196 = vmatprep.subr.bf16.mxu0 %v480
    %1197 = vmatpush1.bf16.msra.mxu0 %v479
    %1198 = vmatprep.subr.bf16.mxu0 %v477
    %1199 = vmatpush1.bf16.msra.mxu0 %v476
    %1200 = vmatprep.subr.bf16.mxu0 0
    %1201 = vmatpush2.bf16.msra.mxu0 0
    %1202 = vmatprep.subr.bf16.mxu0 0
    %1203 = vmatpush2.bf16.msra.mxu0 0
    %1204 = vmatprep.subr.bf16.mxu0 0
    %1205 = vmatpush2.bf16.msra.mxu0 0
    %1206 = vmatprep.subr.bf16.mxu0 0
    %1207 = vmatpush2.bf16.msra.mxu0 0
    %1208 = vmatprep.subr.bf16.mxu0 0
    %1209 = vmatpush2.bf16.msra.mxu0 0
    %1210 = vmatprep.subr.bf16.mxu0 0
    %1211 = vmatpush2.bf16.msra.mxu0 0
    %1212 = vmatprep.subr.bf16.mxu0 0
    %1213 = vmatpush2.bf16.msra.mxu0 0
    %1214 = vmatprep.subr.bf16.mxu0 0
    %1215 = vmatpush2.bf16.msra.mxu0 0
    %1216 = vmatprep.mubr.bf16.mxu0 0
    %1217 = vmatmul.mubr.bf16.gmra.mxu0 %v1183
    %v1218 = vpop.f32.mrf.mxu0
    %v1219 = vadd.f32 0.0, %v1218
    %v1220 = vpop.f32.mrf.mxu0
    %v1221 = vadd.f32 0.0, %v1220
    %v1222 = vpop.f32.mrf.mxu0
    %v1223 = vpop.f32.mrf.mxu0
    %1224 = vdwg.mxu0
    %1225 = vmatprep.subr.bf16.mxu0 0
    %1226 = vmatpush1.bf16.msra.mxu0 %v499
    %1227 = vmatprep.subr.bf16.mxu0 0
    %1228 = vmatpush1.bf16.msra.mxu0 %v496
    %1229 = vmatprep.subr.bf16.mxu0 0
    %1230 = vmatpush1.bf16.msra.mxu0 %v493
    %1231 = vmatprep.subr.bf16.mxu0 0
    %1232 = vmatpush1.bf16.msra.mxu0 %v490
    %1233 = vmatprep.subr.bf16.mxu0 0
    %1234 = vmatpush1.bf16.msra.mxu0 %v487
    %1235 = vmatprep.subr.bf16.mxu0 0
    %1236 = vmatpush1.bf16.msra.mxu0 %v484
    %1237 = vmatprep.subr.bf16.mxu0 0
    %1238 = vmatpush1.bf16.msra.mxu0 %v481
    %1239 = vmatprep.subr.bf16.mxu0 0
    %1240 = vmatpush1.bf16.msra.mxu0 %v478
    %1241 = vmatprep.subr.bf16.mxu0 0
    %1242 = vmatpush2.bf16.msra.mxu0 0
    %1243 = vmatprep.subr.bf16.mxu0 0
    %1244 = vmatpush2.bf16.msra.mxu0 0
    %1245 = vmatprep.subr.bf16.mxu0 0
    %1246 = vmatpush2.bf16.msra.mxu0 0
    %1247 = vmatprep.subr.bf16.mxu0 0
    %1248 = vmatpush2.bf16.msra.mxu0 0
    %1249 = vmatprep.subr.bf16.mxu0 0
    %1250 = vmatpush2.bf16.msra.mxu0 0
    %1251 = vmatprep.subr.bf16.mxu0 0
    %1252 = vmatpush2.bf16.msra.mxu0 0
    %1253 = vmatprep.subr.bf16.mxu0 0
    %1254 = vmatpush2.bf16.msra.mxu0 0
    %1255 = vmatprep.subr.bf16.mxu0 0
    %1256 = vmatpush2.bf16.msra.mxu0 0
    %1257 = vmatprep.mubr.bf16.mxu0 0
    %1258 = vmatmul.mubr.bf16.gmra.mxu0 %v1183
    %v1259 = vpop.f32.mrf.mxu0
    %v1260 = vadd.f32 0.0, %v1259
    %v1261 = vpop.f32.mrf.mxu0
    %v1262 = vpop.f32.mrf.mxu0
    %v1263 = vpop.f32.mrf.mxu0
    %1264 = vdwg.mxu0
    %v1265 = vadd.f32 %v1180, %v1219
    %v1266 = vxor.u32 %v1265, 2147483648
    %v1267 = vmul.f32 %v1266, 1.442695
    %v1268 = vpow.pop %v1267
    %v1269 = vadd.f32 %v1268, 1.0
    %v1270 = vrcp.pop %v1269
    %v1271 = vmul.f32 1.0, %v1270
    %v1272 = vadd.f32 %v1181, %v1221
    %v1273 = vxor.u32 %v1272, 2147483648
    %v1274 = vmul.f32 %v1273, 1.442695
    %v1275 = vpow.pop %v1274
    %v1276 = vadd.f32 %v1275, 1.0
    %v1277 = vrcp.pop %v1276
    %v1278 = vmul.f32 1.0, %v1277
    %v1279 = vadd.f32 %v1260, %v388
    %v1280 = vmul.f32 %v1271, %v1279
    %v1281 = vadd.f32 %v1182, %v1280
    %v1282 = vtanh.pop %v1281
    %v1283 = vsub.f32 1.0, %v1278
    %v1284 = vmul.f32 %v1283, %v1282
    %v1285 = vmul.f32 %v1278, %v1176
    %v1286 = vadd.f32 %v1284, %v1285
    %s1287 = smul.u32 7, 3
    %s1288 = smul.addr %s1287, 8
    %s1289 = scalar_lea.vmem [#allocation2], %s1288
    %v1290 = vld [vmem:[%s1289] sm:$0xff]
    %v1291 = vld [vmem:[%s1289 + $0x8] sm:$0xff]
    %v1292 = vld [vmem:[%s1289 + $0x10] sm:$0xff]
    %v1293 = vpack.c.bf16 %v1286, %v1286
    %1294 = vmatprep.subr.bf16.mxu0 %v498
    %1295 = vmatpush1.bf16.msra.mxu0 %v497
    %1296 = vmatprep.subr.bf16.mxu0 %v495
    %1297 = vmatpush1.bf16.msra.mxu0 %v494
    %1298 = vmatprep.subr.bf16.mxu0 %v492
    %1299 = vmatpush1.bf16.msra.mxu0 %v491
    %1300 = vmatprep.subr.bf16.mxu0 %v489
    %1301 = vmatpush1.bf16.msra.mxu0 %v488
    %1302 = vmatprep.subr.bf16.mxu0 %v486
    %1303 = vmatpush1.bf16.msra.mxu0 %v485
    %1304 = vmatprep.subr.bf16.mxu0 %v483
    %1305 = vmatpush1.bf16.msra.mxu0 %v482
    %1306 = vmatprep.subr.bf16.mxu0 %v480
    %1307 = vmatpush1.bf16.msra.mxu0 %v479
    %1308 = vmatprep.subr.bf16.mxu0 %v477
    %1309 = vmatpush1.bf16.msra.mxu0 %v476
    %1310 = vmatprep.subr.bf16.mxu0 0
    %1311 = vmatpush2.bf16.msra.mxu0 0
    %1312 = vmatprep.subr.bf16.mxu0 0
    %1313 = vmatpush2.bf16.msra.mxu0 0
    %1314 = vmatprep.subr.bf16.mxu0 0
    %1315 = vmatpush2.bf16.msra.mxu0 0
    %1316 = vmatprep.subr.bf16.mxu0 0
    %1317 = vmatpush2.bf16.msra.mxu0 0
    %1318 = vmatprep.subr.bf16.mxu0 0
    %1319 = vmatpush2.bf16.msra.mxu0 0
    %1320 = vmatprep.subr.bf16.mxu0 0
    %1321 = vmatpush2.bf16.msra.mxu0 0
    %1322 = vmatprep.subr.bf16.mxu0 0
    %1323 = vmatpush2.bf16.msra.mxu0 0
    %1324 = vmatprep.subr.bf16.mxu0 0
    %1325 = vmatpush2.bf16.msra.mxu0 0
    %1326 = vmatprep.mubr.bf16.mxu0 0
    %1327 = vmatmul.mubr.bf16.gmra.mxu0 %v1293
    %v1328 = vpop.f32.mrf.mxu0
    %v1329 = vadd.f32 0.0, %v1328
    %v1330 = vpop.f32.mrf.mxu0
    %v1331 = vadd.f32 0.0, %v1330
    %v1332 = vpop.f32.mrf.mxu0
    %v1333 = vpop.f32.mrf.mxu0
    %1334 = vdwg.mxu0
    %1335 = vmatprep.subr.bf16.mxu0 0
    %1336 = vmatpush1.bf16.msra.mxu0 %v499
    %1337 = vmatprep.subr.bf16.mxu0 0
    %1338 = vmatpush1.bf16.msra.mxu0 %v496
    %1339 = vmatprep.subr.bf16.mxu0 0
    %1340 = vmatpush1.bf16.msra.mxu0 %v493
    %1341 = vmatprep.subr.bf16.mxu0 0
    %1342 = vmatpush1.bf16.msra.mxu0 %v490
    %1343 = vmatprep.subr.bf16.mxu0 0
    %1344 = vmatpush1.bf16.msra.mxu0 %v487
    %1345 = vmatprep.subr.bf16.mxu0 0
    %1346 = vmatpush1.bf16.msra.mxu0 %v484
    %1347 = vmatprep.subr.bf16.mxu0 0
    %1348 = vmatpush1.bf16.msra.mxu0 %v481
    %1349 = vmatprep.subr.bf16.mxu0 0
    %1350 = vmatpush1.bf16.msra.mxu0 %v478
    %1351 = vmatprep.subr.bf16.mxu0 0
    %1352 = vmatpush2.bf16.msra.mxu0 0
    %1353 = vmatprep.subr.bf16.mxu0 0
    %1354 = vmatpush2.bf16.msra.mxu0 0
    %1355 = vmatprep.subr.bf16.mxu0 0
    %1356 = vmatpush2.bf16.msra.mxu0 0
    %1357 = vmatprep.subr.bf16.mxu0 0
    %1358 = vmatpush2.bf16.msra.mxu0 0
    %1359 = vmatprep.subr.bf16.mxu0 0
    %1360 = vmatpush2.bf16.msra.mxu0 0
    %1361 = vmatprep.subr.bf16.mxu0 0
    %1362 = vmatpush2.bf16.msra.mxu0 0
    %1363 = vmatprep.subr.bf16.mxu0 0
    %1364 = vmatpush2.bf16.msra.mxu0 0
    %1365 = vmatprep.subr.bf16.mxu0 0
    %1366 = vmatpush2.bf16.msra.mxu0 0
    %1367 = vmatprep.mubr.bf16.mxu0 0
    %1368 = vmatmul.mubr.bf16.gmra.mxu0 %v1293
    %v1369 = vpop.f32.mrf.mxu0
    %v1370 = vadd.f32 0.0, %v1369
    %v1371 = vpop.f32.mrf.mxu0
    %v1372 = vpop.f32.mrf.mxu0
    %v1373 = vpop.f32.mrf.mxu0
    %1374 = vdwg.mxu0
    %v1375 = vadd.f32 %v1290, %v1329
    %v1376 = vxor.u32 %v1375, 2147483648
    %v1377 = vmul.f32 %v1376, 1.442695
    %v1378 = vpow.pop %v1377
    %v1379 = vadd.f32 %v1378, 1.0
    %v1380 = vrcp.pop %v1379
    %v1381 = vmul.f32 1.0, %v1380
    %v1382 = vadd.f32 %v1291, %v1331
    %v1383 = vxor.u32 %v1382, 2147483648
    %v1384 = vmul.f32 %v1383, 1.442695
    %v1385 = vpow.pop %v1384
    %v1386 = vadd.f32 %v1385, 1.0
    %v1387 = vrcp.pop %v1386
    %v1388 = vmul.f32 1.0, %v1387
    %v1389 = vadd.f32 %v1370, %v388
    %v1390 = vmul.f32 %v1381, %v1389
    %v1391 = vadd.f32 %v1292, %v1390
    %v1392 = vtanh.pop %v1391
    %v1393 = vsub.f32 1.0, %v1388
    %v1394 = vmul.f32 %v1393, %v1392
    %v1395 = vmul.f32 %v1388, %v1286
    %v1396 = vadd.f32 %v1394, %v1395
    %vm1397 = vcmp.gt.f32.partialorder %v1396, 0.0
    %v1398 = vmul.f32 %v1396, 0.1
    %v1399 = vsel %vm1397, %v1396, %v1398
    %v1400 = vld [vmem:[#allocation6] sm:$0xff]
    %v1401 = vld [vmem:[#allocation6 + $0x8] sm:$0xff]
    %v1402 = vld [vmem:[#allocation6 + $0x10] sm:$0xff]
    %v1403 = vld [vmem:[#allocation6 + $0x18] sm:$0xff]
    %v1404 = vld [vmem:[#allocation6 + $0x20] sm:$0xff]
    %v1405 = vld [vmem:[#allocation6 + $0x28] sm:$0xff]
    %v1406 = vld [vmem:[#allocation6 + $0x30] sm:$0xff]
    %v1407 = vld [vmem:[#allocation6 + $0x38] sm:$0xff]
    %v1408 = vld [vmem:[#allocation6 + $0x40] sm:$0xff]
    %v1409 = vld [vmem:[#allocation6 + $0x48] sm:$0xff]
    %v1410 = vld [vmem:[#allocation6 + $0x50] sm:$0xff]
    %v1411 = vld [vmem:[#allocation6 + $0x58] sm:$0xff]
    %v1412 = vld [vmem:[#allocation6 + $0x60] sm:$0xff]
    %v1413 = vld [vmem:[#allocation6 + $0x68] sm:$0xff]
    %v1414 = vld [vmem:[#allocation6 + $0x70] sm:$0xff]
    %v1415 = vld [vmem:[#allocation6 + $0x78] sm:$0xff]
    %v1416 = vld [vmem:[%s6] sm:$0x1]
    %v1418 = vlaneseq
    %v1419 = vshrl.u32 %v1418, 7
    %v1420 = vsub.s32 0, %v1419
    %v1421 = vrot.slane %v1416, %v1420
    %1423 = vmatprep.subr.mxu0 0.0
    %1424 = vmatpush1.msra.mxu0 %v1415
    %1425 = vmatprep.subr.mxu0 0.0
    %1426 = vmatpush1.msra.mxu0 %v1414
    %1427 = vmatprep.subr.mxu0 0.0
    %1428 = vmatpush1.msra.mxu0 %v1413
    %1429 = vmatprep.subr.mxu0 0.0
    %1430 = vmatpush1.msra.mxu0 %v1412
    %1431 = vmatprep.subr.mxu0 0.0
    %1432 = vmatpush1.msra.mxu0 %v1411
    %1433 = vmatprep.subr.mxu0 0.0
    %1434 = vmatpush1.msra.mxu0 %v1410
    %1435 = vmatprep.subr.mxu0 0.0
    %1436 = vmatpush1.msra.mxu0 %v1409
    %1437 = vmatprep.subr.mxu0 0.0
    %1438 = vmatpush1.msra.mxu0 %v1408
    %1439 = vmatprep.subr.mxu0 0.0
    %1440 = vmatpush1.msra.mxu0 %v1407
    %1441 = vmatprep.subr.mxu0 0.0
    %1442 = vmatpush1.msra.mxu0 %v1406
    %1443 = vmatprep.subr.mxu0 0.0
    %1444 = vmatpush1.msra.mxu0 %v1405
    %1445 = vmatprep.subr.mxu0 0.0
    %1446 = vmatpush1.msra.mxu0 %v1404
    %1447 = vmatprep.subr.mxu0 0.0
    %1448 = vmatpush1.msra.mxu0 %v1403
    %1449 = vmatprep.subr.mxu0 0.0
    %1450 = vmatpush1.msra.mxu0 %v1402
    %1451 = vmatprep.subr.mxu0 0.0
    %1452 = vmatpush1.msra.mxu0 %v1401
    %1453 = vmatprep.subr.mxu0 0.0
    %1454 = vmatpush1.msra.mxu0 %v1400
    %1455 = vmatprep.subr.mxu0 0.0
    %1456 = vmatpush2.msra.mxu0 0.0
    %1457 = vmatprep.subr.mxu0 0.0
    %1458 = vmatpush2.msra.mxu0 0.0
    %1459 = vmatprep.subr.mxu0 0.0
    %1460 = vmatpush2.msra.mxu0 0.0
    %1461 = vmatprep.subr.mxu0 0.0
    %1462 = vmatpush2.msra.mxu0 0.0
    %1463 = vmatprep.subr.mxu0 0.0
    %1464 = vmatpush2.msra.mxu0 0.0
    %1465 = vmatprep.subr.mxu0 0.0
    %1466 = vmatpush2.msra.mxu0 0.0
    %1467 = vmatprep.subr.mxu0 0.0
    %1468 = vmatpush2.msra.mxu0 0.0
    %1469 = vmatprep.subr.mxu0 0.0
    %1470 = vmatpush2.msra.mxu0 0.0
    %1471 = vmatprep.subr.mxu0 0.0
    %1472 = vmatpush2.msra.mxu0 0.0
    %1473 = vmatprep.subr.mxu0 0.0
    %1474 = vmatpush2.msra.mxu0 0.0
    %1475 = vmatprep.subr.mxu0 0.0
    %1476 = vmatpush2.msra.mxu0 0.0
    %1477 = vmatprep.subr.mxu0 0.0
    %1478 = vmatpush2.msra.mxu0 0.0
    %1479 = vmatprep.subr.mxu0 0.0
    %1480 = vmatpush2.msra.mxu0 0.0
    %1481 = vmatprep.subr.mxu0 0.0
    %1482 = vmatpush2.msra.mxu0 0.0
    %1483 = vmatprep.subr.mxu0 0.0
    %1484 = vmatpush2.msra.mxu0 0.0
    %1485 = vmatprep.subr.mxu0 0.0
    %1486 = vmatpush2.msra.mxu0 0.0
    %1487 = vmatprep.mubr.f32.mxu0 0.0
    %1488 = vmatmul.mubr.f32.gmra.mxu0 %v1399
    %v1489 = vpop.f32.mrf.mxu0
    %v1490 = vadd.f32 %v1421, %v1489
    %v1491 = vpop.f32.mrf.mxu0
    %1492 = vdwg.mxu0
    %1493 = vst [vmem:[#allocation8] sm:$0xff] %v1490
    // Predicated region
    $region38: #{tpu_custom_call.1} parent=1 // pred_check
      _
    $region39: #{tpu_custom_call.1} parent=1 // pred_check_branch
      %1495 = sbr.rel (0) target = $region41
    $region40: #{tpu_custom_call.1} parent=1 // pred_region
      %s1497 = ssub.s32 128, 128
      %1498 = vsyncadd [#allocation5], %s1497
      %s1500 = sshll.u32 [#allocation8], 4
      %s1501 = int_to_ptr.vmem [resolvable:$true] %s1500
      %1503 = dma.vmem_to_hbm [thread:$0]  %s1501, 128, %s7, [#allocation5]
    $region41: #{tpu_custom_call.1} parent=1 // pred_fallthru
      _
    // Predicated region
    $region42: #{tpu_custom_call.1} parent=1 // pred_check
      _
    $region43: #{tpu_custom_call.1} parent=1 // pred_check_branch
      %1505 = sbr.rel (0) target = $region45
    $region44: #{tpu_custom_call.1} parent=1 // pred_region
      %1506 = dma.done [#allocation5], 128
    $region45: #{tpu_custom_call.1} parent=1 // pred_fallthru
      _
    %1507 = vsyncpa [#allocation4], 1
    %1508 = vsyncpa [#allocation7], 1
    %1509 = vsyncpa [#allocation5], 1

</llo_original>
